<compile_context>
chip_gen: v6e
topology: v6e:2x2x1
jax: 0.10.0
libtpu: 0.0.40
codegen_flags: <defaults>
</compile_context>

<pallas_src>
import jax
import jax.numpy as jnp
from jax import lax
from jax.experimental import pallas as pl
from jax.experimental.pallas import tpu as pltpu

LANE = 128


def _round_up(v, m):
    return (v + m - 1) // m * m


# ---------------------------------------------------------------------------
# Stage 1: per-edge MLP   msg = ReLU(flow @ W1 + b1) @ W2 + b2   (E-only grid)
# ---------------------------------------------------------------------------
def mlp_kernel(flow_ref, w1_ref, b1_ref, w2_ref, b2_ref, msg_ref):
    # Layer 1: bf16 MXU operands, f32 accumulation (single fused K = node+edge dim).
    h = (jnp.dot(flow_ref[...], w1_ref[...],
                 preferred_element_type=jnp.float32) + b1_ref[...])
    h = jnp.maximum(h, 0.0)
    # Layer 2: bf16 MXU operands, f32 accumulation.
    msg = (jnp.dot(h.astype(jnp.bfloat16), w2_ref[...],
                   preferred_element_type=jnp.float32) + b2_ref[...])
    msg_ref[...] = msg.astype(jnp.bfloat16)


# ---------------------------------------------------------------------------
# Stage 2: scatter-sum   out[n] = sum_{e: row[e]==n} msg[e]      ((N, E) grid)
# ---------------------------------------------------------------------------
def scatter_kernel(row_ref, msg_ref, out_ref):
    n_idx = pl.program_id(0)           # node-tile index ("parallel")
    e_idx = pl.program_id(1)           # edge-tile index ("arbitrary" reduction)
    tile_n = out_ref.shape[0]
    tile_e = msg_ref.shape[0]

    # Output block is resident across the e axis (index_map ignores e):
    # accumulate directly into out_ref, no scratch needed.
    @pl.when(e_idx == 0)
    def _():
        out_ref[...] = jnp.zeros_like(out_ref)

    # Subtract the node-tile base from the 1 x tile_e row vector (cheap),
    # then compare against a plain iota.  Padded edges carry row = -1 and
    # rows belonging to other node tiles fall outside [0, tile_n): no match.
    local_row = row_ref[...] - n_idx * tile_n                      # [1, tile_e]
    node_ids = lax.broadcasted_iota(jnp.int32, (tile_n, tile_e), 0)
    onehot = (local_row == node_ids).astype(jnp.bfloat16)          # [tN, tE]

    # One-hot is exact in bf16; scatter-sum via MXU with f32 accumulation.
    out_ref[...] += jnp.dot(onehot, msg_ref[...],
                            preferred_element_type=jnp.float32)    # [tN, Op]


def node_model(x, edge_index, edge_attr, params, *, tile_e=1024, tile_n=256):
    """x:[N,node_dim], edge_index:[2,E], edge_attr:[E,edge_dim] -> [N,out_dim]."""
    N, node_dim = x.shape
    E, edge_dim = edge_attr.shape
    D = node_dim + edge_dim

    # Clamp tiles to the (padded) problem size; keep alignment requirements.
    tile_e = max(LANE, min(tile_e, _round_up(E, LANE)))
    tile_n = max(8, min(tile_n, _round_up(N, 8)))
    assert tile_e % LANE == 0 and tile_n % 8 == 0

    row = edge_index[0].astype(jnp.int32)                            # [E]

    w1 = params["w1"].astype(jnp.bfloat16)                           # [D, H]
    b1 = params["b1"].reshape(1, -1).astype(jnp.float32)             # [1, H]
    w2 = params["w2"].astype(jnp.bfloat16)                           # [H, O]
    b2 = params["b2"].reshape(1, -1).astype(jnp.float32)             # [1, O]
    H = w1.shape[1]
    O = w2.shape[1]

    # Pad feature dims to 128 lanes (lane-dense stores) and E/N to tiles.
    Hp = _round_up(H, LANE)
    Op = _round_up(O, LANE)
    E_pad = _round_up(E, tile_e)
    N_pad = _round_up(N, tile_n)

    w1p = jnp.zeros((D, Hp), jnp.bfloat16).at[:, :H].set(w1)
    b1p = jnp.zeros((1, Hp), jnp.float32).at[:, :H].set(b1)
    w2p = jnp.zeros((Hp, Op), jnp.bfloat16).at[:H, :O].set(w2)
    b2p = jnp.zeros((1, Op), jnp.float32).at[:, :O].set(b2)

    # Gather + concat in the wrapper, materialized once as a padded bf16 buffer.
    flow = jnp.concatenate([jnp.take(x, row, axis=0), edge_attr], axis=1)
    flow_p = jnp.pad(flow.astype(jnp.bfloat16), ((0, E_pad - E), (0, 0)))
    row_p = jnp.full((1, E_pad), -1, jnp.int32).at[0, :E].set(row)   # -1 = padding

    n_e_tiles = E_pad // tile_e
    n_n_tiles = N_pad // tile_n

    # ---- Stage 1: edge MLP, computed exactly once over edge tiles ----------
    msg = pl.pallas_call(
        mlp_kernel,
        out_shape=jax.ShapeDtypeStruct((E_pad, Op), jnp.bfloat16),
        grid_spec=pltpu.PrefetchScalarGridSpec(
            num_scalar_prefetch=0,
            grid=(n_e_tiles,),
            in_specs=[
                pl.BlockSpec((tile_e, D), lambda e: (e, 0)),      # flow stream (bf16)
                pl.BlockSpec((D, Hp), lambda e: (0, 0)),          # W1 resident
                pl.BlockSpec((1, Hp), lambda e: (0, 0)),          # b1 resident
                pl.BlockSpec((Hp, Op), lambda e: (0, 0)),         # W2 resident
                pl.BlockSpec((1, Op), lambda e: (0, 0)),          # b2 resident
            ],
            out_specs=pl.BlockSpec((tile_e, Op), lambda e: (e, 0)),
        ),
        compiler_params=pltpu.CompilerParams(
            dimension_semantics=("parallel",),
            vmem_limit_bytes=32 * 1024 * 1024,
        ),
    )(flow_p, w1p, b1p, w2p, b2p)

    # ---- Stage 2: one-hot scatter-sum over (node tiles, edge tiles) --------
    out = pl.pallas_call(
        scatter_kernel,
        out_shape=jax.ShapeDtypeStruct((N_pad, Op), jnp.float32),
        grid_spec=pltpu.PrefetchScalarGridSpec(
            num_scalar_prefetch=0,
            grid=(n_n_tiles, n_e_tiles),
            in_specs=[
                pl.BlockSpec((1, tile_e), lambda n, e: (0, e)),   # row indices
                pl.BlockSpec((tile_e, Op), lambda n, e: (e, 0)),  # msg stream (bf16)
            ],
            out_specs=pl.BlockSpec((tile_n, Op), lambda n, e: (n, 0)),
        ),
        compiler_params=pltpu.CompilerParams(
            dimension_semantics=("parallel", "arbitrary"),
            vmem_limit_bytes=32 * 1024 * 1024,
        ),
    )(row_p, msg)

    return out[:N, :O]


if __name__ == "__main__":
    # Small synthetic graph (big enough to exercise multi-tile grids on both
    # stages: 2 edge tiles x 2 node tiles at tile_e=512, tile_n=128).
    N, E = 200, 1000
    node_dim, edge_dim = 16, 16
    hidden, out_dim = 32, 16

    key = jax.random.PRNGKey(0)
    ks = jax.random.split(key, 8)
    x = jax.random.normal(ks[0], (N, node_dim), jnp.float32)
    edge_attr = jax.random.normal(ks[1], (E, edge_dim), jnp.float32)
    row = jax.random.randint(ks[2], (E,), 0, N)
    col = jax.random.randint(ks[3], (E,), 0, N)
    edge_index = jnp.stack([row, col], axis=0)

    # node_mlp params: Linear(node_dim+edge_dim, hidden) -> ReLU -> Linear(hidden, out_dim)
    params = {
        "w1": jax.random.normal(ks[4], (node_dim + edge_dim, hidden), jnp.float32) * 0.1,
        "b1": jax.random.normal(ks[5], (hidden,), jnp.float32) * 0.1,
        "w2": jax.random.normal(ks[6], (hidden, out_dim), jnp.float32) * 0.1,
        "b2": jax.random.normal(ks[7], (out_dim,), jnp.float32) * 0.1,
    }

    out = node_model(x, edge_index, edge_attr, params, tile_e=512, tile_n=128)
    jax.block_until_ready(out)

    # Pure-JAX f32 reference of the PyTorch forward (scatter-sum aggregation).
    flow = jnp.concatenate([x[row], edge_attr], axis=1)
    h_ref = jnp.maximum(flow @ params["w1"] + params["b1"][None, :], 0.0)
    msg_ref = h_ref @ params["w2"] + params["b2"][None, :]
    ref = jnp.zeros((N, out_dim), jnp.float32).at[row].add(msg_ref)

    max_err = float(jnp.max(jnp.abs(out - ref)))
    # Both MLP layers + the scatter run with bf16 MXU operands (f32 accumulation),
    # so compare against the f32 reference with a bf16-level tolerance.
    assert jnp.allclose(out, ref, atol=5e-2, rtol=5e-2), \
        f"mismatch vs reference (max abs err {max_err})"

    print("KERNEL_OK")
</pallas_src>

<mosaic_0001>
module attributes {stable_mosaic.version = 11 : i64} {
  func.func @mlp_kernel(%arg0: i32, %arg1: memref<512x32xbf16, #tpu.memory_space<vmem>>, %arg2: memref<32x128xbf16, #tpu.memory_space<vmem>>, %arg3: memref<1x128xf32, #tpu.memory_space<vmem>>, %arg4: memref<128x128xbf16, #tpu.memory_space<vmem>>, %arg5: memref<1x128xf32, #tpu.memory_space<vmem>>, %arg6: memref<512x128xbf16, #tpu.memory_space<vmem>>) attributes {dimension_semantics = [#tpu.dimension_semantics<parallel>], iteration_bounds = array<i64: 2>, scalar_prefetch = 0 : i64, scratch_operands = 0 : i64, tpu.core_type = #tpu.core_type<tc>, window_params = [{transform_indices = @transform_0, window_bounds = array<i64: 512, 32>}, {pipeline_mode = #tpu.pipeline_mode<synchronous>, transform_indices = @transform_1, window_bounds = array<i64: 32, 128>}, {pipeline_mode = #tpu.pipeline_mode<synchronous>, transform_indices = @transform_2, window_bounds = array<i64: 1, 128>}, {pipeline_mode = #tpu.pipeline_mode<synchronous>, transform_indices = @transform_3, window_bounds = array<i64: 128, 128>}, {pipeline_mode = #tpu.pipeline_mode<synchronous>, transform_indices = @transform_4, window_bounds = array<i64: 1, 128>}, {transform_indices = @transform_5, window_bounds = array<i64: 512, 128>}]} {
    %c0 = arith.constant 0 : index
    %c0_0 = arith.constant 0 : index
    %0 = vector.load %arg1[%c0, %c0_0] : memref<512x32xbf16, #tpu.memory_space<vmem>>, vector<512x32xbf16>
    %c0_1 = arith.constant 0 : index
    %c0_2 = arith.constant 0 : index
    %1 = vector.load %arg2[%c0_1, %c0_2] : memref<32x128xbf16, #tpu.memory_space<vmem>>, vector<32x128xbf16>
    %cst = arith.constant dense<0.000000e+00> : vector<512x128xf32>
    %2 = tpu.matmul %0, %1, %cst {dimension_numbers = #tpu.dot_dimension_numbers<[1], [0], [0], [1], [0, 0, 1, 1], [], []>} : vector<512x32xbf16>, vector<32x128xbf16>, vector<512x128xf32> -> vector<512x128xf32>
    %c0_3 = arith.constant 0 : index
    %c0_4 = arith.constant 0 : index
    %3 = vector.load %arg3[%c0_3, %c0_4] : memref<1x128xf32, #tpu.memory_space<vmem>>, vector<1x128xf32>
    %4 = vector.broadcast %3 : vector<1x128xf32> to vector<512x128xf32>
    %5 = arith.addf %2, %4 : vector<512x128xf32>
    %cst_5 = arith.constant 0.000000e+00 : f32
    %6 = vector.broadcast %cst_5 : f32 to vector<512x128xf32>
    %7 = arith.maximumf %5, %6 : vector<512x128xf32>
    %8 = arith.truncf %7 : vector<512x128xf32> to vector<512x128xbf16>
    %c0_6 = arith.constant 0 : index
    %c0_7 = arith.constant 0 : index
    %9 = vector.load %arg4[%c0_6, %c0_7] : memref<128x128xbf16, #tpu.memory_space<vmem>>, vector<128x128xbf16>
    %cst_8 = arith.constant dense<0.000000e+00> : vector<512x128xf32>
    %10 = tpu.matmul %8, %9, %cst_8 {dimension_numbers = #tpu.dot_dimension_numbers<[1], [0], [0], [1], [0, 0, 1, 1], [], []>} : vector<512x128xbf16>, vector<128x128xbf16>, vector<512x128xf32> -> vector<512x128xf32>
    %c0_9 = arith.constant 0 : index
    %c0_10 = arith.constant 0 : index
    %11 = vector.load %arg5[%c0_9, %c0_10] : memref<1x128xf32, #tpu.memory_space<vmem>>, vector<1x128xf32>
    %12 = vector.broadcast %11 : vector<1x128xf32> to vector<512x128xf32>
    %13 = arith.addf %10, %12 : vector<512x128xf32>
    %14 = arith.truncf %13 : vector<512x128xf32> to vector<512x128xbf16>
    %c0_11 = arith.constant 0 : index
    %c0_12 = arith.constant 0 : index
    %15 = vector.load %arg6[%c0_11, %c0_12] : memref<512x128xbf16, #tpu.memory_space<vmem>>, vector<512x128xbf16>
    tpu.vector_store %arg6[%c0_11, %c0_12], %14 {strides = array<i32>} : memref<512x128xbf16, #tpu.memory_space<vmem>>, vector<512x128xbf16>,
    return
  }
  func.func @transform_0(%arg0: i32) -> (i32, i32) {
    %c0_i32 = arith.constant 0 : i32
    %c0_i32_0 = arith.constant 0 : i32
    return %arg0, %c0_i32 : i32, i32
  }
  func.func @transform_1(%arg0: i32) -> (i32, i32) {
    %c0_i32 = arith.constant 0 : i32
    %c0_i32_0 = arith.constant 0 : i32
    %c0_i32_1 = arith.constant 0 : i32
    return %c0_i32, %c0_i32_0 : i32, i32
  }
  func.func @transform_2(%arg0: i32) -> (i32, i32) {
    %c0_i32 = arith.constant 0 : i32
    %c0_i32_0 = arith.constant 0 : i32
    %c0_i32_1 = arith.constant 0 : i32
    return %c0_i32, %c0_i32_0 : i32, i32
  }
  func.func @transform_3(%arg0: i32) -> (i32, i32) {
    %c0_i32 = arith.constant 0 : i32
    %c0_i32_0 = arith.constant 0 : i32
    %c0_i32_1 = arith.constant 0 : i32
    return %c0_i32, %c0_i32_0 : i32, i32
  }
  func.func @transform_4(%arg0: i32) -> (i32, i32) {
    %c0_i32 = arith.constant 0 : i32
    %c0_i32_0 = arith.constant 0 : i32
    %c0_i32_1 = arith.constant 0 : i32
    return %c0_i32, %c0_i32_0 : i32, i32
  }
  func.func @transform_5(%arg0: i32) -> (i32, i32) {
    %c0_i32 = arith.constant 0 : i32
    %c0_i32_0 = arith.constant 0 : i32
    return %arg0, %c0_i32 : i32, i32
  }
}

</mosaic_0001>

<llo_original>
// kernel: tpu_custom_call.1
$region0: #{tpu_custom_call.1}
  #allocation0 [shape = 'u32[]', space=smem, size = 0x4, offset = 0x4, fixed_abs, tag = 'smem constant byte address 0x4 - core index']
  #allocation1 [shape = 'u32[144,128]{1,0:T(1,128)}', space=vmem, size = 0x12000, scoped, tag = 'internal scratch']
  %s0 = inlined_call_operand.vmem [shape: bf16[1024,32], index: 0, kind: input, shape index: {}]
  %s1 = inlined_call_operand.vmem [shape: bf16[32,128], index: 1, kind: input, shape index: {}]
  %s2 = inlined_call_operand.vmem [shape: f32[1,128], index: 2, kind: input, shape index: {}]
  %s3 = inlined_call_operand.vmem [shape: bf16[128,128], index: 3, kind: input, shape index: {}]
  %s4 = inlined_call_operand.vmem [shape: f32[1,128], index: 4, kind: input, shape index: {}]
  %s5 = inlined_call_operand.hbm [shape: bf16[1024,128], index: 5, kind: output, shape index: {}]
  %s6 = sld [smem:[#allocation0]]
  $region53: #{tpu_custom_call.1} parent=0
    _
  %s8 = ssub.s32 1, %s6
  %s9 = scalar_select 0, %s8, %s6
  $region1: #{tpu_custom_call.1} parent=0
    #allocation2 [shape = 'u8[262144]{0}', space=vmem, size = 0x40000, scoped, tag = 'output window, operand 0']
    #allocation3 [shape = 's32[2]{0}', space=sflag, size = 0x8, scoped, tag = 'scoped memory for tpu_custom_call.1']
    %10 = vsyncpa [#allocation3], 0
    %s11 = scalar_lea.sflag [#allocation3], 1
    %12 = vsyncpa %s11, 0
    loop: start=0, step=1, limit=4
    $region2: #{tpu_custom_call.1} parent=1 // loop_pre_header
      _
    $region3: #{tpu_custom_call.1} parent=1 // loop_header
      %s14 = sphi 0, %s18
      %p15 = scmp.ge.s32.totalorder %s14, 4
      %s24 = sphi 0, %s26
      %s27 = sphi 0, %s24
      %s28 = sphi 0, %s27
      %s44 = sphi 0, %s28
      %s48 = sphi 0, %s48
      %s50 = sphi 0, %s48
      %s51 = sphi 0, %s50
      %s65 = sphi 0, %s51
      %s69 = sphi 0, %s69
      %s71 = sphi 0, %s69
      %s72 = sphi 0, %s71
      %s86 = sphi 0, %s72
      %s90 = sphi 0, %s90
      %s92 = sphi 0, %s90
      %s93 = sphi 0, %s92
      %s107 = sphi 0, %s93
      %s111 = sphi 0, %s111
      %s113 = sphi 0, %s111
      %s114 = sphi 0, %s113
      %s128 = sphi 0, %s114
      %s134 = sphi 0, %s136
      %s137 = sphi 0, %s134
      %s138 = sphi 0, %s137
      %s154 = sphi 0, %s138
    $region4: #{tpu_custom_call.1} parent=1 // loop_header_branch
      %17 = sbr.rel (%p15) target = $region8
    $region5: #{tpu_custom_call.1} parent=1 // loop_body
      %s19 = ssub.s32 %s14, 1
      %s20 = ssub.s32 %s14, 2
      %s21 = sadd.s32 %s14, 1
      %s22 = ssub.s32 %s14, %s21
      %p23 = scmp.eq.s32.totalorder %s22, 0
      %s25 = sadd.s32 %s24, 1
      %s26 = scalar_select %p23, %s24, %s25
      %p29 = pneg %p23
      %p30 = scmp.eq.s32.totalorder %s14, 1
      %p31 = por %p29, %p30
      %p32 = scmp.ne.s32.totalorder %s24, %s27
      %p33 = scmp.eq.s32.totalorder %s14, 0
      %p34 = por %p32, %p33
      %p35 = scmp.ne.s32.totalorder %s24, %s27
      %p36 = scmp.eq.s32.totalorder %s19, 1
      %p37 = por %p35, %p36
      %p38 = scmp.ne.s32.totalorder %s27, %s28
      %p39 = scmp.eq.s32.totalorder %s19, 0
      %p40 = por %p38, %p39
      %p41 = scmp.ne.s32.totalorder %s27, %s28
      %p42 = scmp.eq.s32.totalorder %s20, 1
      %p43 = por %p41, %p42
      %p45 = scmp.ne.s32.totalorder %s28, %s44
      %p46 = scmp.eq.s32.totalorder %s20, 0
      %p47 = por %p45, %p46
      %s49 = sadd.s32 %s48, 1
      %p52 = scmp.eq.s32.totalorder %s14, 1
      %p53 = scmp.ne.s32.totalorder %s48, %s50
      %p54 = scmp.eq.s32.totalorder %s14, 0
      %p55 = por %p53, %p54
      %p56 = scmp.ne.s32.totalorder %s48, %s50
      %p57 = scmp.eq.s32.totalorder %s19, 1
      %p58 = por %p56, %p57
      %p59 = scmp.ne.s32.totalorder %s50, %s51
      %p60 = scmp.eq.s32.totalorder %s19, 0
      %p61 = por %p59, %p60
      %p62 = scmp.ne.s32.totalorder %s50, %s51
      %p63 = scmp.eq.s32.totalorder %s20, 1
      %p64 = por %p62, %p63
      %p66 = scmp.ne.s32.totalorder %s51, %s65
      %p67 = scmp.eq.s32.totalorder %s20, 0
      %p68 = por %p66, %p67
      %s70 = sadd.s32 %s69, 1
      %p73 = scmp.eq.s32.totalorder %s14, 1
      %p74 = scmp.ne.s32.totalorder %s69, %s71
      %p75 = scmp.eq.s32.totalorder %s14, 0
      %p76 = por %p74, %p75
      %p77 = scmp.ne.s32.totalorder %s69, %s71
      %p78 = scmp.eq.s32.totalorder %s19, 1
      %p79 = por %p77, %p78
      %p80 = scmp.ne.s32.totalorder %s71, %s72
      %p81 = scmp.eq.s32.totalorder %s19, 0
      %p82 = por %p80, %p81
      %p83 = scmp.ne.s32.totalorder %s71, %s72
      %p84 = scmp.eq.s32.totalorder %s20, 1
      %p85 = por %p83, %p84
      %p87 = scmp.ne.s32.totalorder %s72, %s86
      %p88 = scmp.eq.s32.totalorder %s20, 0
      %p89 = por %p87, %p88
      %s91 = sadd.s32 %s90, 1
      %p94 = scmp.eq.s32.totalorder %s14, 1
      %p95 = scmp.ne.s32.totalorder %s90, %s92
      %p96 = scmp.eq.s32.totalorder %s14, 0
      %p97 = por %p95, %p96
      %p98 = scmp.ne.s32.totalorder %s90, %s92
      %p99 = scmp.eq.s32.totalorder %s19, 1
      %p100 = por %p98, %p99
      %p101 = scmp.ne.s32.totalorder %s92, %s93
      %p102 = scmp.eq.s32.totalorder %s19, 0
      %p103 = por %p101, %p102
      %p104 = scmp.ne.s32.totalorder %s92, %s93
      %p105 = scmp.eq.s32.totalorder %s20, 1
      %p106 = por %p104, %p105
      %p108 = scmp.ne.s32.totalorder %s93, %s107
      %p109 = scmp.eq.s32.totalorder %s20, 0
      %p110 = por %p108, %p109
      %s112 = sadd.s32 %s111, 1
      %p115 = scmp.eq.s32.totalorder %s14, 1
      %p116 = scmp.ne.s32.totalorder %s111, %s113
      %p117 = scmp.eq.s32.totalorder %s14, 0
      %p118 = por %p116, %p117
      %p119 = scmp.ne.s32.totalorder %s111, %s113
      %p120 = scmp.eq.s32.totalorder %s19, 1
      %p121 = por %p119, %p120
      %p122 = scmp.ne.s32.totalorder %s113, %s114
      %p123 = scmp.eq.s32.totalorder %s19, 0
      %p124 = por %p122, %p123
      %p125 = scmp.ne.s32.totalorder %s113, %s114
      %p126 = scmp.eq.s32.totalorder %s20, 1
      %p127 = por %p125, %p126
      %p129 = scmp.ne.s32.totalorder %s114, %s128
      %p130 = scmp.eq.s32.totalorder %s20, 0
      %p131 = por %p129, %p130
      %s132 = ssub.s32 %s14, %s21
      %p133 = scmp.eq.s32.totalorder %s132, 0
      %s135 = sadd.s32 %s134, 1
      %s136 = scalar_select %p133, %s134, %s135
      %p139 = pneg %p133
      %p140 = scmp.eq.s32.totalorder %s14, 1
      %p141 = por %p139, %p140
      %p142 = scmp.ne.s32.totalorder %s134, %s137
      %p143 = scmp.eq.s32.totalorder %s14, 0
      %p144 = por %p142, %p143
      %p145 = scmp.ne.s32.totalorder %s134, %s137
      %p146 = scmp.eq.s32.totalorder %s19, 1
      %p147 = por %p145, %p146
      %p148 = scmp.ne.s32.totalorder %s137, %s138
      %p149 = scmp.eq.s32.totalorder %s19, 0
      %p150 = por %p148, %p149
      %p151 = scmp.ne.s32.totalorder %s137, %s138
      %p152 = scmp.eq.s32.totalorder %s20, 1
      %p153 = por %p151, %p152
      %p155 = scmp.ne.s32.totalorder %s138, %s154
      %p156 = scmp.eq.s32.totalorder %s20, 0
      %p157 = por %p155, %p156
      %p158 = scmp.le.s32.totalorder 1, %s14
      %p159 = scmp.lt.s32.totalorder %s14, 3
      %p160 = pnand %p158, %p159
      %p161 = pneg %p160
      // Predicated region
      $region9: #{tpu_custom_call.1} parent=5 // pred_check
        _
      $region10: #{tpu_custom_call.1} parent=5 // pred_check_branch
        %163 = sbr.rel (%p160) target = $region12
      $region11: #{tpu_custom_call.1} parent=5 // pred_region
        %s164 = ssub.s32 %s14, 1
        // Predicated region
        $region13: #{tpu_custom_call.1} parent=11 // pred_check
          %p165 = pneg %p61
        $region14: #{tpu_custom_call.1} parent=11 // pred_check_branch
          %167 = sbr.rel (%p165) target = $region16
        $region15: #{tpu_custom_call.1} parent=11 // pred_region
          _
        $region16: #{tpu_custom_call.1} parent=11 // pred_fallthru
          _
        // Predicated region
        $region17: #{tpu_custom_call.1} parent=11 // pred_check
          %p168 = pneg %p82
        $region18: #{tpu_custom_call.1} parent=11 // pred_check_branch
          %170 = sbr.rel (%p168) target = $region20
        $region19: #{tpu_custom_call.1} parent=11 // pred_region
          _
        $region20: #{tpu_custom_call.1} parent=11 // pred_fallthru
          _
        // Predicated region
        $region21: #{tpu_custom_call.1} parent=11 // pred_check
          %p171 = pneg %p103
        $region22: #{tpu_custom_call.1} parent=11 // pred_check_branch
          %173 = sbr.rel (%p171) target = $region24
        $region23: #{tpu_custom_call.1} parent=11 // pred_region
          _
        $region24: #{tpu_custom_call.1} parent=11 // pred_fallthru
          _
        // Predicated region
        $region25: #{tpu_custom_call.1} parent=11 // pred_check
          %p174 = pneg %p124
        $region26: #{tpu_custom_call.1} parent=11 // pred_check_branch
          %176 = sbr.rel (%p174) target = $region28
        $region27: #{tpu_custom_call.1} parent=11 // pred_region
          _
        $region28: #{tpu_custom_call.1} parent=11 // pred_fallthru
          _
      $region12: #{tpu_custom_call.1} parent=5 // pred_fallthru
        _
      %p177 = scmp.lt.s32.totalorder %s14, 2
      // Predicated region
      $region29: #{tpu_custom_call.1} parent=5 // pred_check
        %p178 = pneg %p177
      $region30: #{tpu_custom_call.1} parent=5 // pred_check_branch
        %180 = sbr.rel (%p178) target = $region32
      $region31: #{tpu_custom_call.1} parent=5 // pred_region
        // Predicated region
        $region33: #{tpu_custom_call.1} parent=31 // pred_check
          %p181 = pneg %p34
        $region34: #{tpu_custom_call.1} parent=31 // pred_check_branch
          %183 = sbr.rel (%p181) target = $region36
        $region35: #{tpu_custom_call.1} parent=31 // pred_region
          %s184 = smul.u32 64, %s14
          %p185 = scmp.lt.s32.totalorder %s184, 127
          %s186 = scalar_select %p185, %s184, 127
          %s187 = smul.addr %s186, 4
          %s188 = scalar_lea.vmem %s0, %s187
          %s189 = smul.u32 64, %s14
        $region36: #{tpu_custom_call.1} parent=31 // pred_fallthru
          _
      $region32: #{tpu_custom_call.1} parent=5 // pred_fallthru
        _
      %p190 = scmp.le.s32.totalorder 1, %s14
      %p191 = scmp.lt.s32.totalorder %s14, 3
      %p192 = pnand %p190, %p191
      %p193 = pneg %p192
      // Predicated region
      $region37: #{tpu_custom_call.1} parent=5 // pred_check
        _
      $region38: #{tpu_custom_call.1} parent=5 // pred_check_branch
        %195 = sbr.rel (%p192) target = $region40
      $region39: #{tpu_custom_call.1} parent=5 // pred_region
        %s196 = ssub.s32 %s14, 1
        %s197 = smul.u32 64, %s19
        %p198 = scmp.lt.s32.totalorder %s197, 127
        %s199 = scalar_select %p198, %s197, 127
        %s200 = smul.addr %s199, 4
        %s201 = scalar_lea.vmem %s0, %s200
        %p202 = pneg %p40
        %p203 = pneg %p37
        %p204 = pneg %p61
        %p205 = pneg %p58
        %p206 = pneg %p82
        %p207 = pneg %p79
        %p208 = pneg %p103
        %p209 = pneg %p100
        %p210 = pneg %p124
        %p211 = pneg %p121
        %p212 = pneg %p150
        %p213 = pneg %p147
        %s214 = sand.u32 %s137, 1
        %s215 = scalar_lea.sflag [#allocation3], %s214
        %s216 = sand.u32 %s137, 1
        %s217 = smul.addr %s216, 256
        %s218 = scalar_lea.vmem [#allocation2], %s217
        %s219 = smul.u32 64, %s19
        %p220 = scmp.lt.s32.totalorder %s219, 127
        %s221 = scalar_select %p220, %s219, 127
        %s222 = smul.addr %s221, 4
        %s223 = scalar_lea.vmem %s0, %s222
        %s224 = smul.u32 64, %s19
        %s225 = smul.u32 64, %s19
        %v227 = vld [vmem:[%s223] sm:$0xf]
        %v228 = vld [vmem:[%s223 + $0x4] sm:$0xf]
        %v229 = vld [vmem:[%s223 + $0x8] sm:$0xf]
        %v230 = vld [vmem:[%s223 + $0xc] sm:$0xf]
        %v231 = vld [vmem:[%s223 + $0x10] sm:$0xf]
        %v232 = vld [vmem:[%s223 + $0x14] sm:$0xf]
        %v233 = vld [vmem:[%s223 + $0x18] sm:$0xf]
        %v234 = vld [vmem:[%s223 + $0x1c] sm:$0xf]
        %v235 = vld [vmem:[%s223 + $0x20] sm:$0xf]
        %v236 = vld [vmem:[%s223 + $0x24] sm:$0xf]
        %v237 = vld [vmem:[%s223 + $0x28] sm:$0xf]
        %v238 = vld [vmem:[%s223 + $0x2c] sm:$0xf]
        %v239 = vld [vmem:[%s223 + $0x30] sm:$0xf]
        %v240 = vld [vmem:[%s223 + $0x34] sm:$0xf]
        %v241 = vld [vmem:[%s223 + $0x38] sm:$0xf]
        %v242 = vld [vmem:[%s223 + $0x3c] sm:$0xf]
        %v243 = vld [vmem:[%s223 + $0x40] sm:$0xf]
        %v244 = vld [vmem:[%s223 + $0x44] sm:$0xf]
        %v245 = vld [vmem:[%s223 + $0x48] sm:$0xf]
        %v246 = vld [vmem:[%s223 + $0x4c] sm:$0xf]
        %v247 = vld [vmem:[%s223 + $0x50] sm:$0xf]
        %v248 = vld [vmem:[%s223 + $0x54] sm:$0xf]
        %v249 = vld [vmem:[%s223 + $0x58] sm:$0xf]
        %v250 = vld [vmem:[%s223 + $0x5c] sm:$0xf]
        %v251 = vld [vmem:[%s223 + $0x60] sm:$0xf]
        %v252 = vld [vmem:[%s223 + $0x64] sm:$0xf]
        %v253 = vld [vmem:[%s223 + $0x68] sm:$0xf]
        %v254 = vld [vmem:[%s223 + $0x6c] sm:$0xf]
        %v255 = vld [vmem:[%s223 + $0x70] sm:$0xf]
        %v256 = vld [vmem:[%s223 + $0x74] sm:$0xf]
        %v257 = vld [vmem:[%s223 + $0x78] sm:$0xf]
        %v258 = vld [vmem:[%s223 + $0x7c] sm:$0xf]
        %v259 = vld [vmem:[%s223 + $0x80] sm:$0xf]
        %v260 = vld [vmem:[%s223 + $0x84] sm:$0xf]
        %v261 = vld [vmem:[%s223 + $0x88] sm:$0xf]
        %v262 = vld [vmem:[%s223 + $0x8c] sm:$0xf]
        %v263 = vld [vmem:[%s223 + $0x90] sm:$0xf]
        %v264 = vld [vmem:[%s223 + $0x94] sm:$0xf]
        %v265 = vld [vmem:[%s223 + $0x98] sm:$0xf]
        %v266 = vld [vmem:[%s223 + $0x9c] sm:$0xf]
        %v267 = vld [vmem:[%s223 + $0xa0] sm:$0xf]
        %v268 = vld [vmem:[%s223 + $0xa4] sm:$0xf]
        %v269 = vld [vmem:[%s223 + $0xa8] sm:$0xf]
        %v270 = vld [vmem:[%s223 + $0xac] sm:$0xf]
        %v271 = vld [vmem:[%s223 + $0xb0] sm:$0xf]
        %v272 = vld [vmem:[%s223 + $0xb4] sm:$0xf]
        %v273 = vld [vmem:[%s223 + $0xb8] sm:$0xf]
        %v274 = vld [vmem:[%s223 + $0xbc] sm:$0xf]
        %v275 = vld [vmem:[%s223 + $0xc0] sm:$0xf]
        %v276 = vld [vmem:[%s223 + $0xc4] sm:$0xf]
        %v277 = vld [vmem:[%s223 + $0xc8] sm:$0xf]
        %v278 = vld [vmem:[%s223 + $0xcc] sm:$0xf]
        %v279 = vld [vmem:[%s223 + $0xd0] sm:$0xf]
        %v280 = vld [vmem:[%s223 + $0xd4] sm:$0xf]
        %v281 = vld [vmem:[%s223 + $0xd8] sm:$0xf]
        %v282 = vld [vmem:[%s223 + $0xdc] sm:$0xf]
        %v283 = vld [vmem:[%s223 + $0xe0] sm:$0xf]
        %v284 = vld [vmem:[%s223 + $0xe4] sm:$0xf]
        %v285 = vld [vmem:[%s223 + $0xe8] sm:$0xf]
        %v286 = vld [vmem:[%s223 + $0xec] sm:$0xf]
        %v287 = vld [vmem:[%s223 + $0xf0] sm:$0xf]
        %v288 = vld [vmem:[%s223 + $0xf4] sm:$0xf]
        %v289 = vld [vmem:[%s223 + $0xf8] sm:$0xf]
        %v290 = vld [vmem:[%s223 + $0xfc] sm:$0xf]
        %v291 = vld [vmem:[%s1] sm:$0xf]
        %v292 = vld [vmem:[%s1 + $0x4] sm:$0xf]
        %v293 = vld [vmem:[%s1 + $0x8] sm:$0xf]
        %v294 = vld [vmem:[%s1 + $0xc] sm:$0xf]
        %v295 = vld [vmem:[%s2] sm:$0x1]
        %v297 = vlaneseq
        %v298 = vshrl.u32 %v297, 7
        %v299 = vsub.s32 0, %v298
        %v300 = vrot.slane %v295, %v299
        %v366 = vunpack.c.l.b16 %v227
        %v367 = vunpack.c.l.b16 %v228
        %v368 = vunpack.c.l.b16 %v229
        %v369 = vunpack.c.l.b16 %v230
        %v370 = vunpack.c.l.b16 %v231
        %v371 = vunpack.c.l.b16 %v232
        %v372 = vunpack.c.l.b16 %v233
        %v373 = vunpack.c.l.b16 %v234
        %v374 = vunpack.c.l.b16 %v235
        %v375 = vunpack.c.l.b16 %v236
        %v376 = vunpack.c.l.b16 %v237
        %v377 = vunpack.c.l.b16 %v238
        %v378 = vunpack.c.l.b16 %v239
        %v379 = vunpack.c.l.b16 %v240
        %v380 = vunpack.c.l.b16 %v241
        %v381 = vunpack.c.l.b16 %v242
        %v382 = vunpack.c.l.b16 %v243
        %v383 = vunpack.c.l.b16 %v244
        %v384 = vunpack.c.l.b16 %v245
        %v385 = vunpack.c.l.b16 %v246
        %v386 = vunpack.c.l.b16 %v247
        %v387 = vunpack.c.l.b16 %v248
        %v388 = vunpack.c.l.b16 %v249
        %v389 = vunpack.c.l.b16 %v250
        %v390 = vunpack.c.l.b16 %v251
        %v391 = vunpack.c.l.b16 %v252
        %v392 = vunpack.c.l.b16 %v253
        %v393 = vunpack.c.l.b16 %v254
        %v394 = vunpack.c.l.b16 %v255
        %v395 = vunpack.c.l.b16 %v256
        %v396 = vunpack.c.l.b16 %v257
        %v397 = vunpack.c.l.b16 %v258
        %v398 = vunpack.c.l.b16 %v259
        %v399 = vunpack.c.l.b16 %v260
        %v400 = vunpack.c.l.b16 %v261
        %v401 = vunpack.c.l.b16 %v262
        %v402 = vunpack.c.l.b16 %v263
        %v403 = vunpack.c.l.b16 %v264
        %v404 = vunpack.c.l.b16 %v265
        %v405 = vunpack.c.l.b16 %v266
        %v406 = vunpack.c.l.b16 %v267
        %v407 = vunpack.c.l.b16 %v268
        %v408 = vunpack.c.l.b16 %v269
        %v409 = vunpack.c.l.b16 %v270
        %v410 = vunpack.c.l.b16 %v271
        %v411 = vunpack.c.l.b16 %v272
        %v412 = vunpack.c.l.b16 %v273
        %v413 = vunpack.c.l.b16 %v274
        %v414 = vunpack.c.l.b16 %v275
        %v415 = vunpack.c.l.b16 %v276
        %v416 = vunpack.c.l.b16 %v277
        %v417 = vunpack.c.l.b16 %v278
        %v418 = vunpack.c.l.b16 %v279
        %v419 = vunpack.c.l.b16 %v280
        %v420 = vunpack.c.l.b16 %v281
        %v421 = vunpack.c.l.b16 %v282
        %v422 = vunpack.c.l.b16 %v283
        %v423 = vunpack.c.l.b16 %v284
        %v424 = vunpack.c.l.b16 %v285
        %v425 = vunpack.c.l.b16 %v286
        %v426 = vunpack.c.l.b16 %v287
        %v427 = vunpack.c.l.b16 %v288
        %v428 = vunpack.c.l.b16 %v289
        %v429 = vunpack.c.l.b16 %v290
        %v430 = vpack.c.b16 %v367, %v366
        %v431 = vpack.c.b16 %v369, %v368
        %v432 = vpack.c.b16 %v371, %v370
        %v433 = vpack.c.b16 %v373, %v372
        %v434 = vpack.c.b16 %v375, %v374
        %v435 = vpack.c.b16 %v377, %v376
        %v436 = vpack.c.b16 %v379, %v378
        %v437 = vpack.c.b16 %v381, %v380
        %v438 = vpack.c.b16 %v383, %v382
        %v439 = vpack.c.b16 %v385, %v384
        %v440 = vpack.c.b16 %v387, %v386
        %v441 = vpack.c.b16 %v389, %v388
        %v442 = vpack.c.b16 %v391, %v390
        %v443 = vpack.c.b16 %v393, %v392
        %v444 = vpack.c.b16 %v395, %v394
        %v445 = vpack.c.b16 %v397, %v396
        %v446 = vpack.c.b16 %v399, %v398
        %v447 = vpack.c.b16 %v401, %v400
        %v448 = vpack.c.b16 %v403, %v402
        %v449 = vpack.c.b16 %v405, %v404
        %v450 = vpack.c.b16 %v407, %v406
        %v451 = vpack.c.b16 %v409, %v408
        %v452 = vpack.c.b16 %v411, %v410
        %v453 = vpack.c.b16 %v413, %v412
        %v454 = vpack.c.b16 %v415, %v414
        %v455 = vpack.c.b16 %v417, %v416
        %v456 = vpack.c.b16 %v419, %v418
        %v457 = vpack.c.b16 %v421, %v420
        %v458 = vpack.c.b16 %v423, %v422
        %v459 = vpack.c.b16 %v425, %v424
        %v460 = vpack.c.b16 %v427, %v426
        %v461 = vpack.c.b16 %v429, %v428
        %v466 = vunpack.c.l.b16 %v291
        %v467 = vunpack.c.l.b16 %v292
        %v468 = vunpack.c.l.b16 %v293
        %v469 = vunpack.c.l.b16 %v294
        %v470 = vpack.c.b16 %v467, %v466
        %v471 = vpack.c.b16 %v469, %v468
        %vm474 = vcmask 261120
        %v476 = vsel %vm474, %v430, 0
        %v479 = vsel %vm474, %v431, 0
        %v482 = vsel %vm474, %v432, 0
        %v485 = vsel %vm474, %v433, 0
        %v488 = vsel %vm474, %v434, 0
        %v491 = vsel %vm474, %v435, 0
        %v494 = vsel %vm474, %v436, 0
        %v497 = vsel %vm474, %v437, 0
        %v500 = vsel %vm474, %v438, 0
        %v503 = vsel %vm474, %v439, 0
        %v506 = vsel %vm474, %v440, 0
        %v509 = vsel %vm474, %v441, 0
        %v512 = vsel %vm474, %v442, 0
        %v515 = vsel %vm474, %v443, 0
        %v518 = vsel %vm474, %v444, 0
        %v521 = vsel %vm474, %v445, 0
        %v524 = vsel %vm474, %v446, 0
        %v527 = vsel %vm474, %v447, 0
        %v530 = vsel %vm474, %v448, 0
        %v533 = vsel %vm474, %v449, 0
        %v536 = vsel %vm474, %v450, 0
        %v539 = vsel %vm474, %v451, 0
        %v542 = vsel %vm474, %v452, 0
        %v545 = vsel %vm474, %v453, 0
        %v548 = vsel %vm474, %v454, 0
        %v551 = vsel %vm474, %v455, 0
        %v554 = vsel %vm474, %v456, 0
        %v557 = vsel %vm474, %v457, 0
        %v560 = vsel %vm474, %v458, 0
        %v563 = vsel %vm474, %v459, 0
        %v566 = vsel %vm474, %v460, 0
        %v569 = vsel %vm474, %v461, 0
        %571 = vmatprep.subr.bf16.mxu0 0
        %572 = vmatpush1.bf16.msra.mxu0 0
        %573 = vmatprep.subr.bf16.mxu0 0
        %574 = vmatpush1.bf16.msra.mxu0 0
        %575 = vmatprep.subr.bf16.mxu0 0
        %576 = vmatpush1.bf16.msra.mxu0 0
        %577 = vmatprep.subr.bf16.mxu0 0
        %578 = vmatpush1.bf16.msra.mxu0 0
        %579 = vmatprep.subr.bf16.mxu0 0
        %580 = vmatpush1.bf16.msra.mxu0 0
        %581 = vmatprep.subr.bf16.mxu0 0
        %582 = vmatpush1.bf16.msra.mxu0 0
        %583 = vmatprep.subr.bf16.mxu0 0
        %584 = vmatpush1.bf16.msra.mxu0 %v471
        %585 = vmatprep.subr.bf16.mxu0 0
        %586 = vmatpush1.bf16.msra.mxu0 %v470
        %587 = vmatprep.subr.bf16.mxu0 0
        %588 = vmatpush2.bf16.msra.mxu0 0
        %589 = vmatprep.subr.bf16.mxu0 0
        %590 = vmatpush2.bf16.msra.mxu0 0
        %591 = vmatprep.subr.bf16.mxu0 0
        %592 = vmatpush2.bf16.msra.mxu0 0
        %593 = vmatprep.subr.bf16.mxu0 0
        %594 = vmatpush2.bf16.msra.mxu0 0
        %595 = vmatprep.subr.bf16.mxu0 0
        %596 = vmatpush2.bf16.msra.mxu0 0
        %597 = vmatprep.subr.bf16.mxu0 0
        %598 = vmatpush2.bf16.msra.mxu0 0
        %599 = vmatprep.subr.bf16.mxu0 0
        %600 = vmatpush2.bf16.msra.mxu0 0
        %601 = vmatprep.subr.bf16.mxu0 0
        %602 = vmatpush2.bf16.msra.mxu0 0
        %603 = vmatprep.mubr.bf16.mxu0 0
        %604 = vmatmul.mubr.bf16.gmra.mxu0 %v476
        %v605 = vpop.f32.mrf.mxu0
        %v606 = vadd.f32 %v300, %v605
        %v607 = vpop.f32.mrf.mxu0
        %v608 = vpop.f32.mrf.mxu0
        %v609 = vadd.f32 %v300, %v608
        %v610 = vpop.f32.mrf.mxu0
        %611 = vmatprep.mubr.bf16.mxu0 0
        %612 = vmatmul.mubr.bf16.gmra.mxu0 %v479
        %v613 = vpop.f32.mrf.mxu0
        %v614 = vadd.f32 %v300, %v613
        %v615 = vpop.f32.mrf.mxu0
        %v616 = vpop.f32.mrf.mxu0
        %v617 = vadd.f32 %v300, %v616
        %v618 = vpop.f32.mrf.mxu0
        %619 = vmatprep.mubr.bf16.mxu0 0
        %620 = vmatmul.mubr.bf16.gmra.mxu0 %v482
        %v621 = vpop.f32.mrf.mxu0
        %v622 = vadd.f32 %v300, %v621
        %v623 = vpop.f32.mrf.mxu0
        %v624 = vpop.f32.mrf.mxu0
        %v625 = vadd.f32 %v300, %v624
        %v626 = vpop.f32.mrf.mxu0
        %627 = vmatprep.mubr.bf16.mxu0 0
        %628 = vmatmul.mubr.bf16.gmra.mxu0 %v485
        %v629 = vpop.f32.mrf.mxu0
        %v630 = vadd.f32 %v300, %v629
        %v631 = vpop.f32.mrf.mxu0
        %v632 = vpop.f32.mrf.mxu0
        %v633 = vadd.f32 %v300, %v632
        %v634 = vpop.f32.mrf.mxu0
        %635 = vmatprep.mubr.bf16.mxu0 0
        %636 = vmatmul.mubr.bf16.gmra.mxu0 %v488
        %v637 = vpop.f32.mrf.mxu0
        %v638 = vadd.f32 %v300, %v637
        %v639 = vpop.f32.mrf.mxu0
        %v640 = vpop.f32.mrf.mxu0
        %v641 = vadd.f32 %v300, %v640
        %v642 = vpop.f32.mrf.mxu0
        %643 = vmatprep.mubr.bf16.mxu0 0
        %644 = vmatmul.mubr.bf16.gmra.mxu0 %v491
        %v645 = vpop.f32.mrf.mxu0
        %v646 = vadd.f32 %v300, %v645
        %v647 = vpop.f32.mrf.mxu0
        %v648 = vpop.f32.mrf.mxu0
        %v649 = vadd.f32 %v300, %v648
        %v650 = vpop.f32.mrf.mxu0
        %651 = vmatprep.mubr.bf16.mxu0 0
        %652 = vmatmul.mubr.bf16.gmra.mxu0 %v494
        %v653 = vpop.f32.mrf.mxu0
        %v654 = vadd.f32 %v300, %v653
        %v655 = vpop.f32.mrf.mxu0
        %v656 = vpop.f32.mrf.mxu0
        %v657 = vadd.f32 %v300, %v656
        %v658 = vpop.f32.mrf.mxu0
        %659 = vmatprep.mubr.bf16.mxu0 0
        %660 = vmatmul.mubr.bf16.gmra.mxu0 %v497
        %v661 = vpop.f32.mrf.mxu0
        %v662 = vadd.f32 %v300, %v661
        %v663 = vpop.f32.mrf.mxu0
        %v664 = vpop.f32.mrf.mxu0
        %v665 = vadd.f32 %v300, %v664
        %v666 = vpop.f32.mrf.mxu0
        %667 = vmatprep.mubr.bf16.mxu0 0
        %668 = vmatmul.mubr.bf16.gmra.mxu0 %v500
        %v669 = vpop.f32.mrf.mxu0
        %v670 = vadd.f32 %v300, %v669
        %v671 = vpop.f32.mrf.mxu0
        %v672 = vpop.f32.mrf.mxu0
        %v673 = vadd.f32 %v300, %v672
        %v674 = vpop.f32.mrf.mxu0
        %675 = vmatprep.mubr.bf16.mxu0 0
        %676 = vmatmul.mubr.bf16.gmra.mxu0 %v503
        %v677 = vpop.f32.mrf.mxu0
        %v678 = vadd.f32 %v300, %v677
        %v679 = vpop.f32.mrf.mxu0
        %v680 = vpop.f32.mrf.mxu0
        %v681 = vadd.f32 %v300, %v680
        %v682 = vpop.f32.mrf.mxu0
        %683 = vmatprep.mubr.bf16.mxu0 0
        %684 = vmatmul.mubr.bf16.gmra.mxu0 %v506
        %v685 = vpop.f32.mrf.mxu0
        %v686 = vadd.f32 %v300, %v685
        %v687 = vpop.f32.mrf.mxu0
        %v688 = vpop.f32.mrf.mxu0
        %v689 = vadd.f32 %v300, %v688
        %v690 = vpop.f32.mrf.mxu0
        %691 = vmatprep.mubr.bf16.mxu0 0
        %692 = vmatmul.mubr.bf16.gmra.mxu0 %v509
        %v693 = vpop.f32.mrf.mxu0
        %v694 = vadd.f32 %v300, %v693
        %v695 = vpop.f32.mrf.mxu0
        %v696 = vpop.f32.mrf.mxu0
        %v697 = vadd.f32 %v300, %v696
        %v698 = vpop.f32.mrf.mxu0
        %699 = vmatprep.mubr.bf16.mxu0 0
        %700 = vmatmul.mubr.bf16.gmra.mxu0 %v512
        %v701 = vpop.f32.mrf.mxu0
        %v702 = vadd.f32 %v300, %v701
        %v703 = vpop.f32.mrf.mxu0
        %v704 = vpop.f32.mrf.mxu0
        %v705 = vadd.f32 %v300, %v704
        %v706 = vpop.f32.mrf.mxu0
        %707 = vmatprep.mubr.bf16.mxu0 0
        %708 = vmatmul.mubr.bf16.gmra.mxu0 %v515
        %v709 = vpop.f32.mrf.mxu0
        %v710 = vadd.f32 %v300, %v709
        %v711 = vpop.f32.mrf.mxu0
        %v712 = vpop.f32.mrf.mxu0
        %v713 = vadd.f32 %v300, %v712
        %v714 = vpop.f32.mrf.mxu0
        %715 = vmatprep.mubr.bf16.mxu0 0
        %716 = vmatmul.mubr.bf16.gmra.mxu0 %v518
        %v717 = vpop.f32.mrf.mxu0
        %v718 = vadd.f32 %v300, %v717
        %v719 = vpop.f32.mrf.mxu0
        %v720 = vpop.f32.mrf.mxu0
        %v721 = vadd.f32 %v300, %v720
        %v722 = vpop.f32.mrf.mxu0
        %723 = vmatprep.mubr.bf16.mxu0 0
        %724 = vmatmul.mubr.bf16.gmra.mxu0 %v521
        %v725 = vpop.f32.mrf.mxu0
        %v726 = vadd.f32 %v300, %v725
        %v727 = vpop.f32.mrf.mxu0
        %v728 = vpop.f32.mrf.mxu0
        %v729 = vadd.f32 %v300, %v728
        %v730 = vpop.f32.mrf.mxu0
        %731 = vmatprep.mubr.bf16.mxu0 0
        %732 = vmatmul.mubr.bf16.gmra.mxu0 %v524
        %v733 = vpop.f32.mrf.mxu0
        %v734 = vadd.f32 %v300, %v733
        %v735 = vpop.f32.mrf.mxu0
        %v736 = vpop.f32.mrf.mxu0
        %v737 = vadd.f32 %v300, %v736
        %v738 = vpop.f32.mrf.mxu0
        %739 = vmatprep.mubr.bf16.mxu0 0
        %740 = vmatmul.mubr.bf16.gmra.mxu0 %v527
        %v741 = vpop.f32.mrf.mxu0
        %v742 = vadd.f32 %v300, %v741
        %v743 = vpop.f32.mrf.mxu0
        %v744 = vpop.f32.mrf.mxu0
        %v745 = vadd.f32 %v300, %v744
        %v746 = vpop.f32.mrf.mxu0
        %747 = vmatprep.mubr.bf16.mxu0 0
        %748 = vmatmul.mubr.bf16.gmra.mxu0 %v530
        %v749 = vpop.f32.mrf.mxu0
        %v750 = vadd.f32 %v300, %v749
        %v751 = vpop.f32.mrf.mxu0
        %v752 = vpop.f32.mrf.mxu0
        %v753 = vadd.f32 %v300, %v752
        %v754 = vpop.f32.mrf.mxu0
        %755 = vmatprep.mubr.bf16.mxu0 0
        %756 = vmatmul.mubr.bf16.gmra.mxu0 %v533
        %v757 = vpop.f32.mrf.mxu0
        %v758 = vadd.f32 %v300, %v757
        %v759 = vpop.f32.mrf.mxu0
        %v760 = vpop.f32.mrf.mxu0
        %v761 = vadd.f32 %v300, %v760
        %v762 = vpop.f32.mrf.mxu0
        %763 = vmatprep.mubr.bf16.mxu0 0
        %764 = vmatmul.mubr.bf16.gmra.mxu0 %v536
        %v765 = vpop.f32.mrf.mxu0
        %v766 = vadd.f32 %v300, %v765
        %v767 = vpop.f32.mrf.mxu0
        %v768 = vpop.f32.mrf.mxu0
        %v769 = vadd.f32 %v300, %v768
        %v770 = vpop.f32.mrf.mxu0
        %771 = vmatprep.mubr.bf16.mxu0 0
        %772 = vmatmul.mubr.bf16.gmra.mxu0 %v539
        %v773 = vpop.f32.mrf.mxu0
        %v774 = vadd.f32 %v300, %v773
        %v775 = vpop.f32.mrf.mxu0
        %v776 = vpop.f32.mrf.mxu0
        %v777 = vadd.f32 %v300, %v776
        %v778 = vpop.f32.mrf.mxu0
        %779 = vmatprep.mubr.bf16.mxu0 0
        %780 = vmatmul.mubr.bf16.gmra.mxu0 %v542
        %v781 = vpop.f32.mrf.mxu0
        %v782 = vadd.f32 %v300, %v781
        %v783 = vpop.f32.mrf.mxu0
        %v784 = vpop.f32.mrf.mxu0
        %v785 = vadd.f32 %v300, %v784
        %v786 = vpop.f32.mrf.mxu0
        %787 = vmatprep.mubr.bf16.mxu0 0
        %788 = vmatmul.mubr.bf16.gmra.mxu0 %v545
        %v789 = vpop.f32.mrf.mxu0
        %v790 = vadd.f32 %v300, %v789
        %v791 = vpop.f32.mrf.mxu0
        %v792 = vpop.f32.mrf.mxu0
        %v793 = vadd.f32 %v300, %v792
        %v794 = vpop.f32.mrf.mxu0
        %795 = vmatprep.mubr.bf16.mxu0 0
        %796 = vmatmul.mubr.bf16.gmra.mxu0 %v548
        %v797 = vpop.f32.mrf.mxu0
        %v798 = vadd.f32 %v300, %v797
        %v799 = vpop.f32.mrf.mxu0
        %v800 = vpop.f32.mrf.mxu0
        %v801 = vadd.f32 %v300, %v800
        %v802 = vpop.f32.mrf.mxu0
        %803 = vmatprep.mubr.bf16.mxu0 0
        %804 = vmatmul.mubr.bf16.gmra.mxu0 %v551
        %v805 = vpop.f32.mrf.mxu0
        %v806 = vadd.f32 %v300, %v805
        %v807 = vpop.f32.mrf.mxu0
        %v808 = vpop.f32.mrf.mxu0
        %v809 = vadd.f32 %v300, %v808
        %v810 = vpop.f32.mrf.mxu0
        %811 = vmatprep.mubr.bf16.mxu0 0
        %812 = vmatmul.mubr.bf16.gmra.mxu0 %v554
        %v813 = vpop.f32.mrf.mxu0
        %v814 = vadd.f32 %v300, %v813
        %v815 = vpop.f32.mrf.mxu0
        %v816 = vpop.f32.mrf.mxu0
        %v817 = vadd.f32 %v300, %v816
        %v818 = vpop.f32.mrf.mxu0
        %819 = vmatprep.mubr.bf16.mxu0 0
        %820 = vmatmul.mubr.bf16.gmra.mxu0 %v557
        %v821 = vpop.f32.mrf.mxu0
        %v822 = vadd.f32 %v300, %v821
        %v823 = vpop.f32.mrf.mxu0
        %v824 = vpop.f32.mrf.mxu0
        %v825 = vadd.f32 %v300, %v824
        %v826 = vpop.f32.mrf.mxu0
        %827 = vmatprep.mubr.bf16.mxu0 0
        %828 = vmatmul.mubr.bf16.gmra.mxu0 %v560
        %v829 = vpop.f32.mrf.mxu0
        %v830 = vadd.f32 %v300, %v829
        %v831 = vpop.f32.mrf.mxu0
        %v832 = vpop.f32.mrf.mxu0
        %v833 = vadd.f32 %v300, %v832
        %v834 = vpop.f32.mrf.mxu0
        %835 = vmatprep.mubr.bf16.mxu0 0
        %836 = vmatmul.mubr.bf16.gmra.mxu0 %v563
        %v837 = vpop.f32.mrf.mxu0
        %v838 = vadd.f32 %v300, %v837
        %v839 = vpop.f32.mrf.mxu0
        %v840 = vpop.f32.mrf.mxu0
        %v841 = vadd.f32 %v300, %v840
        %v842 = vpop.f32.mrf.mxu0
        %843 = vmatprep.mubr.bf16.mxu0 0
        %844 = vmatmul.mubr.bf16.gmra.mxu0 %v566
        %v845 = vpop.f32.mrf.mxu0
        %v846 = vadd.f32 %v300, %v845
        %v847 = vpop.f32.mrf.mxu0
        %v848 = vpop.f32.mrf.mxu0
        %v849 = vadd.f32 %v300, %v848
        %v850 = vpop.f32.mrf.mxu0
        %851 = vmatprep.mubr.bf16.mxu0 0
        %852 = vmatmul.mubr.bf16.gmra.mxu0 %v569
        %v853 = vpop.f32.mrf.mxu0
        %v854 = vadd.f32 %v300, %v853
        %v855 = vpop.f32.mrf.mxu0
        %v856 = vpop.f32.mrf.mxu0
        %v857 = vadd.f32 %v300, %v856
        %v858 = vpop.f32.mrf.mxu0
        %859 = vdwg.mxu0
        %v860 = vmax.f32 %v606, 0.0
        %v861 = vmax.f32 %v609, 0.0
        %v862 = vmax.f32 %v614, 0.0
        %v863 = vmax.f32 %v617, 0.0
        %v864 = vmax.f32 %v622, 0.0
        %v865 = vmax.f32 %v625, 0.0
        %v866 = vmax.f32 %v630, 0.0
        %v867 = vmax.f32 %v633, 0.0
        %v868 = vmax.f32 %v638, 0.0
        %v869 = vmax.f32 %v641, 0.0
        %v870 = vmax.f32 %v646, 0.0
        %v871 = vmax.f32 %v649, 0.0
        %v872 = vmax.f32 %v654, 0.0
        %v873 = vmax.f32 %v657, 0.0
        %v874 = vmax.f32 %v662, 0.0
        %v875 = vmax.f32 %v665, 0.0
        %v876 = vmax.f32 %v670, 0.0
        %v877 = vmax.f32 %v673, 0.0
        %v878 = vmax.f32 %v678, 0.0
        %v879 = vmax.f32 %v681, 0.0
        %v880 = vmax.f32 %v686, 0.0
        %v881 = vmax.f32 %v689, 0.0
        %v882 = vmax.f32 %v694, 0.0
        %v883 = vmax.f32 %v697, 0.0
        %v884 = vmax.f32 %v702, 0.0
        %v885 = vmax.f32 %v705, 0.0
        %v886 = vmax.f32 %v710, 0.0
        %v887 = vmax.f32 %v713, 0.0
        %v888 = vmax.f32 %v718, 0.0
        %v889 = vmax.f32 %v721, 0.0
        %v890 = vmax.f32 %v726, 0.0
        %v891 = vmax.f32 %v729, 0.0
        %v892 = vmax.f32 %v734, 0.0
        %v893 = vmax.f32 %v737, 0.0
        %v894 = vmax.f32 %v742, 0.0
        %v895 = vmax.f32 %v745, 0.0
        %v896 = vmax.f32 %v750, 0.0
        %v897 = vmax.f32 %v753, 0.0
        %v898 = vmax.f32 %v758, 0.0
        %v899 = vmax.f32 %v761, 0.0
        %v900 = vmax.f32 %v766, 0.0
        %v901 = vmax.f32 %v769, 0.0
        %v902 = vmax.f32 %v774, 0.0
        %v903 = vmax.f32 %v777, 0.0
        %v904 = vmax.f32 %v782, 0.0
        %v905 = vmax.f32 %v785, 0.0
        %v906 = vmax.f32 %v790, 0.0
        %v907 = vmax.f32 %v793, 0.0
        %v908 = vmax.f32 %v798, 0.0
        %v909 = vmax.f32 %v801, 0.0
        %v910 = vmax.f32 %v806, 0.0
        %v911 = vmax.f32 %v809, 0.0
        %v912 = vmax.f32 %v814, 0.0
        %v913 = vmax.f32 %v817, 0.0
        %v914 = vmax.f32 %v822, 0.0
        %v915 = vmax.f32 %v825, 0.0
        %v916 = vmax.f32 %v830, 0.0
        %v917 = vmax.f32 %v833, 0.0
        %v918 = vmax.f32 %v838, 0.0
        %v919 = vmax.f32 %v841, 0.0
        %v920 = vmax.f32 %v846, 0.0
        %v921 = vmax.f32 %v849, 0.0
        %v922 = vmax.f32 %v854, 0.0
        %v923 = vmax.f32 %v857, 0.0
        %v924 = vpack.c.bf16 %v861, %v860
        %v925 = vpack.c.bf16 %v863, %v862
        %v926 = vpack.c.bf16 %v865, %v864
        %v927 = vpack.c.bf16 %v867, %v866
        %v928 = vpack.c.bf16 %v869, %v868
        %v929 = vpack.c.bf16 %v871, %v870
        %v930 = vpack.c.bf16 %v873, %v872
        %v931 = vpack.c.bf16 %v875, %v874
        %v932 = vpack.c.bf16 %v877, %v876
        %v933 = vpack.c.bf16 %v879, %v878
        %v934 = vpack.c.bf16 %v881, %v880
        %v935 = vpack.c.bf16 %v883, %v882
        %v936 = vpack.c.bf16 %v885, %v884
        %v937 = vpack.c.bf16 %v887, %v886
        %v938 = vpack.c.bf16 %v889, %v888
        %v939 = vpack.c.bf16 %v891, %v890
        %v940 = vpack.c.bf16 %v893, %v892
        %v941 = vpack.c.bf16 %v895, %v894
        %v942 = vpack.c.bf16 %v897, %v896
        %v943 = vpack.c.bf16 %v899, %v898
        %v944 = vpack.c.bf16 %v901, %v900
        %v945 = vpack.c.bf16 %v903, %v902
        %v946 = vpack.c.bf16 %v905, %v904
        %v947 = vpack.c.bf16 %v907, %v906
        %v948 = vpack.c.bf16 %v909, %v908
        %v949 = vpack.c.bf16 %v911, %v910
        %v950 = vpack.c.bf16 %v913, %v912
        %v951 = vpack.c.bf16 %v915, %v914
        %v952 = vpack.c.bf16 %v917, %v916
        %v953 = vpack.c.bf16 %v919, %v918
        %v954 = vpack.c.bf16 %v921, %v920
        %v955 = vpack.c.bf16 %v923, %v922
        %v956 = vld [vmem:[%s3] sm:$0xf]
        %v957 = vld [vmem:[%s3 + $0x4] sm:$0xf]
        %v958 = vld [vmem:[%s3 + $0x8] sm:$0xf]
        %v959 = vld [vmem:[%s3 + $0xc] sm:$0xf]
        %v960 = vld [vmem:[%s3 + $0x10] sm:$0xf]
        %v961 = vld [vmem:[%s3 + $0x14] sm:$0xf]
        %v962 = vld [vmem:[%s3 + $0x18] sm:$0xf]
        %v963 = vld [vmem:[%s3 + $0x1c] sm:$0xf]
        %v964 = vld [vmem:[%s3 + $0x20] sm:$0xf]
        %v965 = vld [vmem:[%s3 + $0x24] sm:$0xf]
        %v966 = vld [vmem:[%s3 + $0x28] sm:$0xf]
        %v967 = vld [vmem:[%s3 + $0x2c] sm:$0xf]
        %v968 = vld [vmem:[%s3 + $0x30] sm:$0xf]
        %v969 = vld [vmem:[%s3 + $0x34] sm:$0xf]
        %v970 = vld [vmem:[%s3 + $0x38] sm:$0xf]
        %v971 = vld [vmem:[%s3 + $0x3c] sm:$0xf]
        %v972 = vld [vmem:[%s4] sm:$0x1]
        %v974 = vlaneseq
        %v975 = vshrl.u32 %v974, 7
        %v976 = vsub.s32 0, %v975
        %v977 = vrot.slane %v972, %v976
        %v995 = vunpack.c.l.b16 %v956
        %v996 = vunpack.c.l.b16 %v957
        %v997 = vunpack.c.l.b16 %v958
        %v998 = vunpack.c.l.b16 %v959
        %v999 = vunpack.c.l.b16 %v960
        %v1000 = vunpack.c.l.b16 %v961
        %v1001 = vunpack.c.l.b16 %v962
        %v1002 = vunpack.c.l.b16 %v963
        %v1003 = vunpack.c.l.b16 %v964
        %v1004 = vunpack.c.l.b16 %v965
        %v1005 = vunpack.c.l.b16 %v966
        %v1006 = vunpack.c.l.b16 %v967
        %v1007 = vunpack.c.l.b16 %v968
        %v1008 = vunpack.c.l.b16 %v969
        %v1009 = vunpack.c.l.b16 %v970
        %v1010 = vunpack.c.l.b16 %v971
        %v1011 = vpack.c.b16 %v996, %v995
        %v1012 = vpack.c.b16 %v998, %v997
        %v1013 = vpack.c.b16 %v1000, %v999
        %v1014 = vpack.c.b16 %v1002, %v1001
        %v1015 = vpack.c.b16 %v1004, %v1003
        %v1016 = vpack.c.b16 %v1006, %v1005
        %v1017 = vpack.c.b16 %v1008, %v1007
        %v1018 = vpack.c.b16 %v1010, %v1009
        %1027 = vmatprep.subr.bf16.mxu0 0
        %1028 = vmatpush1.bf16.msra.mxu0 %v1018
        %1029 = vmatprep.subr.bf16.mxu0 0
        %1030 = vmatpush1.bf16.msra.mxu0 %v1017
        %1031 = vmatprep.subr.bf16.mxu0 0
        %1032 = vmatpush1.bf16.msra.mxu0 %v1016
        %1033 = vmatprep.subr.bf16.mxu0 0
        %1034 = vmatpush1.bf16.msra.mxu0 %v1015
        %1035 = vmatprep.subr.bf16.mxu0 0
        %1036 = vmatpush1.bf16.msra.mxu0 %v1014
        %1037 = vmatprep.subr.bf16.mxu0 0
        %1038 = vmatpush1.bf16.msra.mxu0 %v1013
        %1039 = vmatprep.subr.bf16.mxu0 0
        %1040 = vmatpush1.bf16.msra.mxu0 %v1012
        %1041 = vmatprep.subr.bf16.mxu0 0
        %1042 = vmatpush1.bf16.msra.mxu0 %v1011
        %1043 = vmatprep.subr.bf16.mxu0 0
        %1044 = vmatpush2.bf16.msra.mxu0 0
        %1045 = vmatprep.subr.bf16.mxu0 0
        %1046 = vmatpush2.bf16.msra.mxu0 0
        %1047 = vmatprep.subr.bf16.mxu0 0
        %1048 = vmatpush2.bf16.msra.mxu0 0
        %1049 = vmatprep.subr.bf16.mxu0 0
        %1050 = vmatpush2.bf16.msra.mxu0 0
        %1051 = vmatprep.subr.bf16.mxu0 0
        %1052 = vmatpush2.bf16.msra.mxu0 0
        %1053 = vmatprep.subr.bf16.mxu0 0
        %1054 = vmatpush2.bf16.msra.mxu0 0
        %1055 = vmatprep.subr.bf16.mxu0 0
        %1056 = vmatpush2.bf16.msra.mxu0 0
        %1057 = vmatprep.subr.bf16.mxu0 0
        %1058 = vmatpush2.bf16.msra.mxu0 0
        %1059 = vmatprep.mubr.bf16.mxu0 0
        %1060 = vmatmul.mubr.bf16.gmra.mxu0 %v924
        %v1061 = vpop.f32.mrf.mxu0
        %v1062 = vadd.f32 %v977, %v1061
        %v1063 = vpop.f32.mrf.mxu0
        %v1064 = vpop.f32.mrf.mxu0
        %v1065 = vadd.f32 %v977, %v1064
        %v1066 = vpop.f32.mrf.mxu0
        %1067 = vmatprep.mubr.bf16.mxu0 0
        %1068 = vmatmul.mubr.bf16.gmra.mxu0 %v925
        %v1069 = vpop.f32.mrf.mxu0
        %v1070 = vadd.f32 %v977, %v1069
        %v1071 = vpop.f32.mrf.mxu0
        %v1072 = vpop.f32.mrf.mxu0
        %v1073 = vadd.f32 %v977, %v1072
        %v1074 = vpop.f32.mrf.mxu0
        %1075 = vmatprep.mubr.bf16.mxu0 0
        %1076 = vmatmul.mubr.bf16.gmra.mxu0 %v926
        %v1077 = vpop.f32.mrf.mxu0
        %v1078 = vadd.f32 %v977, %v1077
        %v1079 = vpop.f32.mrf.mxu0
        %v1080 = vpop.f32.mrf.mxu0
        %v1081 = vadd.f32 %v977, %v1080
        %v1082 = vpop.f32.mrf.mxu0
        %1083 = vmatprep.mubr.bf16.mxu0 0
        %1084 = vmatmul.mubr.bf16.gmra.mxu0 %v927
        %v1085 = vpop.f32.mrf.mxu0
        %v1086 = vadd.f32 %v977, %v1085
        %v1087 = vpop.f32.mrf.mxu0
        %v1088 = vpop.f32.mrf.mxu0
        %v1089 = vadd.f32 %v977, %v1088
        %v1090 = vpop.f32.mrf.mxu0
        %1091 = vmatprep.mubr.bf16.mxu0 0
        %1092 = vmatmul.mubr.bf16.gmra.mxu0 %v928
        %v1093 = vpop.f32.mrf.mxu0
        %v1094 = vadd.f32 %v977, %v1093
        %v1095 = vpop.f32.mrf.mxu0
        %v1096 = vpop.f32.mrf.mxu0
        %v1097 = vadd.f32 %v977, %v1096
        %v1098 = vpop.f32.mrf.mxu0
        %1099 = vmatprep.mubr.bf16.mxu0 0
        %1100 = vmatmul.mubr.bf16.gmra.mxu0 %v929
        %v1101 = vpop.f32.mrf.mxu0
        %v1102 = vadd.f32 %v977, %v1101
        %v1103 = vpop.f32.mrf.mxu0
        %v1104 = vpop.f32.mrf.mxu0
        %v1105 = vadd.f32 %v977, %v1104
        %v1106 = vpop.f32.mrf.mxu0
        %1107 = vmatprep.mubr.bf16.mxu0 0
        %1108 = vmatmul.mubr.bf16.gmra.mxu0 %v930
        %v1109 = vpop.f32.mrf.mxu0
        %v1110 = vadd.f32 %v977, %v1109
        %v1111 = vpop.f32.mrf.mxu0
        %v1112 = vpop.f32.mrf.mxu0
        %v1113 = vadd.f32 %v977, %v1112
        %v1114 = vpop.f32.mrf.mxu0
        %1115 = vmatprep.mubr.bf16.mxu0 0
        %1116 = vmatmul.mubr.bf16.gmra.mxu0 %v931
        %v1117 = vpop.f32.mrf.mxu0
        %v1118 = vadd.f32 %v977, %v1117
        %v1119 = vpop.f32.mrf.mxu0
        %v1120 = vpop.f32.mrf.mxu0
        %v1121 = vadd.f32 %v977, %v1120
        %v1122 = vpop.f32.mrf.mxu0
        %1123 = vmatprep.mubr.bf16.mxu0 0
        %1124 = vmatmul.mubr.bf16.gmra.mxu0 %v932
        %v1125 = vpop.f32.mrf.mxu0
        %v1126 = vadd.f32 %v977, %v1125
        %v1127 = vpop.f32.mrf.mxu0
        %v1128 = vpop.f32.mrf.mxu0
        %v1129 = vadd.f32 %v977, %v1128
        %v1130 = vpop.f32.mrf.mxu0
        %1131 = vmatprep.mubr.bf16.mxu0 0
        %1132 = vmatmul.mubr.bf16.gmra.mxu0 %v933
        %v1133 = vpop.f32.mrf.mxu0
        %v1134 = vadd.f32 %v977, %v1133
        %v1135 = vpop.f32.mrf.mxu0
        %v1136 = vpop.f32.mrf.mxu0
        %v1137 = vadd.f32 %v977, %v1136
        %v1138 = vpop.f32.mrf.mxu0
        %1139 = vmatprep.mubr.bf16.mxu0 0
        %1140 = vmatmul.mubr.bf16.gmra.mxu0 %v934
        %v1141 = vpop.f32.mrf.mxu0
        %v1142 = vadd.f32 %v977, %v1141
        %v1143 = vpop.f32.mrf.mxu0
        %v1144 = vpop.f32.mrf.mxu0
        %v1145 = vadd.f32 %v977, %v1144
        %v1146 = vpop.f32.mrf.mxu0
        %1147 = vmatprep.mubr.bf16.mxu0 0
        %1148 = vmatmul.mubr.bf16.gmra.mxu0 %v935
        %v1149 = vpop.f32.mrf.mxu0
        %v1150 = vadd.f32 %v977, %v1149
        %v1151 = vpop.f32.mrf.mxu0
        %v1152 = vpop.f32.mrf.mxu0
        %v1153 = vadd.f32 %v977, %v1152
        %v1154 = vpop.f32.mrf.mxu0
        %1155 = vmatprep.mubr.bf16.mxu0 0
        %1156 = vmatmul.mubr.bf16.gmra.mxu0 %v936
        %v1157 = vpop.f32.mrf.mxu0
        %v1158 = vadd.f32 %v977, %v1157
        %v1159 = vpop.f32.mrf.mxu0
        %v1160 = vpop.f32.mrf.mxu0
        %v1161 = vadd.f32 %v977, %v1160
        %v1162 = vpop.f32.mrf.mxu0
        %1163 = vmatprep.mubr.bf16.mxu0 0
        %1164 = vmatmul.mubr.bf16.gmra.mxu0 %v937
        %v1165 = vpop.f32.mrf.mxu0
        %v1166 = vadd.f32 %v977, %v1165
        %v1167 = vpop.f32.mrf.mxu0
        %v1168 = vpop.f32.mrf.mxu0
        %v1169 = vadd.f32 %v977, %v1168
        %v1170 = vpop.f32.mrf.mxu0
        %1171 = vmatprep.mubr.bf16.mxu0 0
        %1172 = vmatmul.mubr.bf16.gmra.mxu0 %v938
        %v1173 = vpop.f32.mrf.mxu0
        %v1174 = vadd.f32 %v977, %v1173
        %v1175 = vpop.f32.mrf.mxu0
        %v1176 = vpop.f32.mrf.mxu0
        %v1177 = vadd.f32 %v977, %v1176
        %v1178 = vpop.f32.mrf.mxu0
        %1179 = vmatprep.mubr.bf16.mxu0 0
        %1180 = vmatmul.mubr.bf16.gmra.mxu0 %v939
        %v1181 = vpop.f32.mrf.mxu0
        %v1182 = vadd.f32 %v977, %v1181
        %v1183 = vpop.f32.mrf.mxu0
        %v1184 = vpop.f32.mrf.mxu0
        %v1185 = vadd.f32 %v977, %v1184
        %v1186 = vpop.f32.mrf.mxu0
        %1187 = vmatprep.mubr.bf16.mxu0 0
        %1188 = vmatmul.mubr.bf16.gmra.mxu0 %v940
        %v1189 = vpop.f32.mrf.mxu0
        %v1190 = vadd.f32 %v977, %v1189
        %v1191 = vpop.f32.mrf.mxu0
        %v1192 = vpop.f32.mrf.mxu0
        %v1193 = vadd.f32 %v977, %v1192
        %v1194 = vpop.f32.mrf.mxu0
        %1195 = vmatprep.mubr.bf16.mxu0 0
        %1196 = vmatmul.mubr.bf16.gmra.mxu0 %v941
        %v1197 = vpop.f32.mrf.mxu0
        %v1198 = vadd.f32 %v977, %v1197
        %v1199 = vpop.f32.mrf.mxu0
        %v1200 = vpop.f32.mrf.mxu0
        %v1201 = vadd.f32 %v977, %v1200
        %v1202 = vpop.f32.mrf.mxu0
        %1203 = vmatprep.mubr.bf16.mxu0 0
        %1204 = vmatmul.mubr.bf16.gmra.mxu0 %v942
        %v1205 = vpop.f32.mrf.mxu0
        %v1206 = vadd.f32 %v977, %v1205
        %v1207 = vpop.f32.mrf.mxu0
        %v1208 = vpop.f32.mrf.mxu0
        %v1209 = vadd.f32 %v977, %v1208
        %v1210 = vpop.f32.mrf.mxu0
        %1211 = vmatprep.mubr.bf16.mxu0 0
        %1212 = vmatmul.mubr.bf16.gmra.mxu0 %v943
        %v1213 = vpop.f32.mrf.mxu0
        %v1214 = vadd.f32 %v977, %v1213
        %v1215 = vpop.f32.mrf.mxu0
        %v1216 = vpop.f32.mrf.mxu0
        %v1217 = vadd.f32 %v977, %v1216
        %v1218 = vpop.f32.mrf.mxu0
        %1219 = vmatprep.mubr.bf16.mxu0 0
        %1220 = vmatmul.mubr.bf16.gmra.mxu0 %v944
        %v1221 = vpop.f32.mrf.mxu0
        %v1222 = vadd.f32 %v977, %v1221
        %v1223 = vpop.f32.mrf.mxu0
        %v1224 = vpop.f32.mrf.mxu0
        %v1225 = vadd.f32 %v977, %v1224
        %v1226 = vpop.f32.mrf.mxu0
        %1227 = vmatprep.mubr.bf16.mxu0 0
        %1228 = vmatmul.mubr.bf16.gmra.mxu0 %v945
        %v1229 = vpop.f32.mrf.mxu0
        %v1230 = vadd.f32 %v977, %v1229
        %v1231 = vpop.f32.mrf.mxu0
        %v1232 = vpop.f32.mrf.mxu0
        %v1233 = vadd.f32 %v977, %v1232
        %v1234 = vpop.f32.mrf.mxu0
        %1235 = vmatprep.mubr.bf16.mxu0 0
        %1236 = vmatmul.mubr.bf16.gmra.mxu0 %v946
        %v1237 = vpop.f32.mrf.mxu0
        %v1238 = vadd.f32 %v977, %v1237
        %v1239 = vpop.f32.mrf.mxu0
        %v1240 = vpop.f32.mrf.mxu0
        %v1241 = vadd.f32 %v977, %v1240
        %v1242 = vpop.f32.mrf.mxu0
        %1243 = vmatprep.mubr.bf16.mxu0 0
        %1244 = vmatmul.mubr.bf16.gmra.mxu0 %v947
        %v1245 = vpop.f32.mrf.mxu0
        %v1246 = vadd.f32 %v977, %v1245
        %v1247 = vpop.f32.mrf.mxu0
        %v1248 = vpop.f32.mrf.mxu0
        %v1249 = vadd.f32 %v977, %v1248
        %v1250 = vpop.f32.mrf.mxu0
        %1251 = vmatprep.mubr.bf16.mxu0 0
        %1252 = vmatmul.mubr.bf16.gmra.mxu0 %v948
        %v1253 = vpop.f32.mrf.mxu0
        %v1254 = vadd.f32 %v977, %v1253
        %v1255 = vpop.f32.mrf.mxu0
        %v1256 = vpop.f32.mrf.mxu0
        %v1257 = vadd.f32 %v977, %v1256
        %v1258 = vpop.f32.mrf.mxu0
        %1259 = vmatprep.mubr.bf16.mxu0 0
        %1260 = vmatmul.mubr.bf16.gmra.mxu0 %v949
        %v1261 = vpop.f32.mrf.mxu0
        %v1262 = vadd.f32 %v977, %v1261
        %v1263 = vpop.f32.mrf.mxu0
        %v1264 = vpop.f32.mrf.mxu0
        %v1265 = vadd.f32 %v977, %v1264
        %v1266 = vpop.f32.mrf.mxu0
        %1267 = vmatprep.mubr.bf16.mxu0 0
        %1268 = vmatmul.mubr.bf16.gmra.mxu0 %v950
        %v1269 = vpop.f32.mrf.mxu0
        %v1270 = vadd.f32 %v977, %v1269
        %v1271 = vpop.f32.mrf.mxu0
        %v1272 = vpop.f32.mrf.mxu0
        %v1273 = vadd.f32 %v977, %v1272
        %v1274 = vpop.f32.mrf.mxu0
        %1275 = vmatprep.mubr.bf16.mxu0 0
        %1276 = vmatmul.mubr.bf16.gmra.mxu0 %v951
        %v1277 = vpop.f32.mrf.mxu0
        %v1278 = vadd.f32 %v977, %v1277
        %v1279 = vpop.f32.mrf.mxu0
        %v1280 = vpop.f32.mrf.mxu0
        %v1281 = vadd.f32 %v977, %v1280
        %v1282 = vpop.f32.mrf.mxu0
        %1283 = vmatprep.mubr.bf16.mxu0 0
        %1284 = vmatmul.mubr.bf16.gmra.mxu0 %v952
        %v1285 = vpop.f32.mrf.mxu0
        %v1286 = vadd.f32 %v977, %v1285
        %v1287 = vpop.f32.mrf.mxu0
        %v1288 = vpop.f32.mrf.mxu0
        %v1289 = vadd.f32 %v977, %v1288
        %v1290 = vpop.f32.mrf.mxu0
        %1291 = vmatprep.mubr.bf16.mxu0 0
        %1292 = vmatmul.mubr.bf16.gmra.mxu0 %v953
        %v1293 = vpop.f32.mrf.mxu0
        %v1294 = vadd.f32 %v977, %v1293
        %v1295 = vpop.f32.mrf.mxu0
        %v1296 = vpop.f32.mrf.mxu0
        %v1297 = vadd.f32 %v977, %v1296
        %v1298 = vpop.f32.mrf.mxu0
        %1299 = vmatprep.mubr.bf16.mxu0 0
        %1300 = vmatmul.mubr.bf16.gmra.mxu0 %v954
        %v1301 = vpop.f32.mrf.mxu0
        %v1302 = vadd.f32 %v977, %v1301
        %v1303 = vpop.f32.mrf.mxu0
        %v1304 = vpop.f32.mrf.mxu0
        %v1305 = vadd.f32 %v977, %v1304
        %v1306 = vpop.f32.mrf.mxu0
        %1307 = vmatprep.mubr.bf16.mxu0 0
        %1308 = vmatmul.mubr.bf16.gmra.mxu0 %v955
        %v1309 = vpop.f32.mrf.mxu0
        %v1310 = vadd.f32 %v977, %v1309
        %v1311 = vpop.f32.mrf.mxu0
        %v1312 = vpop.f32.mrf.mxu0
        %v1313 = vadd.f32 %v977, %v1312
        %v1314 = vpop.f32.mrf.mxu0
        %1315 = vdwg.mxu0
        %v1316 = vpack.c.bf16 %v1065, %v1062
        %v1317 = vpack.c.bf16 %v1073, %v1070
        %v1318 = vpack.c.bf16 %v1081, %v1078
        %v1319 = vpack.c.bf16 %v1089, %v1086
        %v1320 = vpack.c.bf16 %v1097, %v1094
        %v1321 = vpack.c.bf16 %v1105, %v1102
        %v1322 = vpack.c.bf16 %v1113, %v1110
        %v1323 = vpack.c.bf16 %v1121, %v1118
        %v1324 = vpack.c.bf16 %v1129, %v1126
        %v1325 = vpack.c.bf16 %v1137, %v1134
        %v1326 = vpack.c.bf16 %v1145, %v1142
        %v1327 = vpack.c.bf16 %v1153, %v1150
        %v1328 = vpack.c.bf16 %v1161, %v1158
        %v1329 = vpack.c.bf16 %v1169, %v1166
        %v1330 = vpack.c.bf16 %v1177, %v1174
        %v1331 = vpack.c.bf16 %v1185, %v1182
        %v1332 = vpack.c.bf16 %v1193, %v1190
        %v1333 = vpack.c.bf16 %v1201, %v1198
        %v1334 = vpack.c.bf16 %v1209, %v1206
        %v1335 = vpack.c.bf16 %v1217, %v1214
        %v1336 = vpack.c.bf16 %v1225, %v1222
        %v1337 = vpack.c.bf16 %v1233, %v1230
        %v1338 = vpack.c.bf16 %v1241, %v1238
        %v1339 = vpack.c.bf16 %v1249, %v1246
        %v1340 = vpack.c.bf16 %v1257, %v1254
        %v1341 = vpack.c.bf16 %v1265, %v1262
        %v1342 = vpack.c.bf16 %v1273, %v1270
        %v1343 = vpack.c.bf16 %v1281, %v1278
        %v1344 = vpack.c.bf16 %v1289, %v1286
        %v1345 = vpack.c.bf16 %v1297, %v1294
        %v1346 = vpack.c.bf16 %v1305, %v1302
        %v1347 = vpack.c.bf16 %v1313, %v1310
        %v1380 = vunpack.c.l.b16 %v1316
        %v1381 = vunpack.c.h.b16 %v1316
        %v1382 = vunpack.c.l.b16 %v1317
        %v1383 = vunpack.c.h.b16 %v1317
        %v1384 = vunpack.c.l.b16 %v1318
        %v1385 = vunpack.c.h.b16 %v1318
        %v1386 = vunpack.c.l.b16 %v1319
        %v1387 = vunpack.c.h.b16 %v1319
        %v1388 = vunpack.c.l.b16 %v1320
        %v1389 = vunpack.c.h.b16 %v1320
        %v1390 = vunpack.c.l.b16 %v1321
        %v1391 = vunpack.c.h.b16 %v1321
        %v1392 = vunpack.c.l.b16 %v1322
        %v1393 = vunpack.c.h.b16 %v1322
        %v1394 = vunpack.c.l.b16 %v1323
        %v1395 = vunpack.c.h.b16 %v1323
        %v1396 = vunpack.c.l.b16 %v1324
        %v1397 = vunpack.c.h.b16 %v1324
        %v1398 = vunpack.c.l.b16 %v1325
        %v1399 = vunpack.c.h.b16 %v1325
        %v1400 = vunpack.c.l.b16 %v1326
        %v1401 = vunpack.c.h.b16 %v1326
        %v1402 = vunpack.c.l.b16 %v1327
        %v1403 = vunpack.c.h.b16 %v1327
        %v1404 = vunpack.c.l.b16 %v1328
        %v1405 = vunpack.c.h.b16 %v1328
        %v1406 = vunpack.c.l.b16 %v1329
        %v1407 = vunpack.c.h.b16 %v1329
        %v1408 = vunpack.c.l.b16 %v1330
        %v1409 = vunpack.c.h.b16 %v1330
        %v1410 = vunpack.c.l.b16 %v1331
        %v1411 = vunpack.c.h.b16 %v1331
        %v1412 = vunpack.c.l.b16 %v1332
        %v1413 = vunpack.c.h.b16 %v1332
        %v1414 = vunpack.c.l.b16 %v1333
        %v1415 = vunpack.c.h.b16 %v1333
        %v1416 = vunpack.c.l.b16 %v1334
        %v1417 = vunpack.c.h.b16 %v1334
        %v1418 = vunpack.c.l.b16 %v1335
        %v1419 = vunpack.c.h.b16 %v1335
        %v1420 = vunpack.c.l.b16 %v1336
        %v1421 = vunpack.c.h.b16 %v1336
        %v1422 = vunpack.c.l.b16 %v1337
        %v1423 = vunpack.c.h.b16 %v1337
        %v1424 = vunpack.c.l.b16 %v1338
        %v1425 = vunpack.c.h.b16 %v1338
        %v1426 = vunpack.c.l.b16 %v1339
        %v1427 = vunpack.c.h.b16 %v1339
        %v1428 = vunpack.c.l.b16 %v1340
        %v1429 = vunpack.c.h.b16 %v1340
        %v1430 = vunpack.c.l.b16 %v1341
        %v1431 = vunpack.c.h.b16 %v1341
        %v1432 = vunpack.c.l.b16 %v1342
        %v1433 = vunpack.c.h.b16 %v1342
        %v1434 = vunpack.c.l.b16 %v1343
        %v1435 = vunpack.c.h.b16 %v1343
        %v1436 = vunpack.c.l.b16 %v1344
        %v1437 = vunpack.c.h.b16 %v1344
        %v1438 = vunpack.c.l.b16 %v1345
        %v1439 = vunpack.c.h.b16 %v1345
        %v1440 = vunpack.c.l.b16 %v1346
        %v1441 = vunpack.c.h.b16 %v1346
        %v1442 = vunpack.c.l.b16 %v1347
        %v1443 = vunpack.c.h.b16 %v1347
        %v1444 = vpack.c.b16 %v1380, %v1380
        %v1445 = vpack.c.b16 %v1381, %v1381
        %v1446 = vpack.c.b16 %v1382, %v1382
        %v1447 = vpack.c.b16 %v1383, %v1383
        %v1448 = vpack.c.b16 %v1384, %v1384
        %v1449 = vpack.c.b16 %v1385, %v1385
        %v1450 = vpack.c.b16 %v1386, %v1386
        %v1451 = vpack.c.b16 %v1387, %v1387
        %v1452 = vpack.c.b16 %v1388, %v1388
        %v1453 = vpack.c.b16 %v1389, %v1389
        %v1454 = vpack.c.b16 %v1390, %v1390
        %v1455 = vpack.c.b16 %v1391, %v1391
        %v1456 = vpack.c.b16 %v1392, %v1392
        %v1457 = vpack.c.b16 %v1393, %v1393
        %v1458 = vpack.c.b16 %v1394, %v1394
        %v1459 = vpack.c.b16 %v1395, %v1395
        %v1460 = vpack.c.b16 %v1396, %v1396
        %v1461 = vpack.c.b16 %v1397, %v1397
        %v1462 = vpack.c.b16 %v1398, %v1398
        %v1463 = vpack.c.b16 %v1399, %v1399
        %v1464 = vpack.c.b16 %v1400, %v1400
        %v1465 = vpack.c.b16 %v1401, %v1401
        %v1466 = vpack.c.b16 %v1402, %v1402
        %v1467 = vpack.c.b16 %v1403, %v1403
        %v1468 = vpack.c.b16 %v1404, %v1404
        %v1469 = vpack.c.b16 %v1405, %v1405
        %v1470 = vpack.c.b16 %v1406, %v1406
        %v1471 = vpack.c.b16 %v1407, %v1407
        %v1472 = vpack.c.b16 %v1408, %v1408
        %v1473 = vpack.c.b16 %v1409, %v1409
        %v1474 = vpack.c.b16 %v1410, %v1410
        %v1475 = vpack.c.b16 %v1411, %v1411
        %v1476 = vpack.c.b16 %v1412, %v1412
        %v1477 = vpack.c.b16 %v1413, %v1413
        %v1478 = vpack.c.b16 %v1414, %v1414
        %v1479 = vpack.c.b16 %v1415, %v1415
        %v1480 = vpack.c.b16 %v1416, %v1416
        %v1481 = vpack.c.b16 %v1417, %v1417
        %v1482 = vpack.c.b16 %v1418, %v1418
        %v1483 = vpack.c.b16 %v1419, %v1419
        %v1484 = vpack.c.b16 %v1420, %v1420
        %v1485 = vpack.c.b16 %v1421, %v1421
        %v1486 = vpack.c.b16 %v1422, %v1422
        %v1487 = vpack.c.b16 %v1423, %v1423
        %v1488 = vpack.c.b16 %v1424, %v1424
        %v1489 = vpack.c.b16 %v1425, %v1425
        %v1490 = vpack.c.b16 %v1426, %v1426
        %v1491 = vpack.c.b16 %v1427, %v1427
        %v1492 = vpack.c.b16 %v1428, %v1428
        %v1493 = vpack.c.b16 %v1429, %v1429
        %v1494 = vpack.c.b16 %v1430, %v1430
        %v1495 = vpack.c.b16 %v1431, %v1431
        %v1496 = vpack.c.b16 %v1432, %v1432
        %v1497 = vpack.c.b16 %v1433, %v1433
        %v1498 = vpack.c.b16 %v1434, %v1434
        %v1499 = vpack.c.b16 %v1435, %v1435
        %v1500 = vpack.c.b16 %v1436, %v1436
        %v1501 = vpack.c.b16 %v1437, %v1437
        %v1502 = vpack.c.b16 %v1438, %v1438
        %v1503 = vpack.c.b16 %v1439, %v1439
        %v1504 = vpack.c.b16 %v1440, %v1440
        %v1505 = vpack.c.b16 %v1441, %v1441
        %v1506 = vpack.c.b16 %v1442, %v1442
        %v1507 = vpack.c.b16 %v1443, %v1443
        %1572 = vst [vmem:[%s218] sm:$0xf] %v1444
        %1573 = vst [vmem:[%s218 + $0x4] sm:$0xf] %v1445
        %1574 = vst [vmem:[%s218 + $0x8] sm:$0xf] %v1446
        %1575 = vst [vmem:[%s218 + $0xc] sm:$0xf] %v1447
        %1576 = vst [vmem:[%s218 + $0x10] sm:$0xf] %v1448
        %1577 = vst [vmem:[%s218 + $0x14] sm:$0xf] %v1449
        %1578 = vst [vmem:[%s218 + $0x18] sm:$0xf] %v1450
        %1579 = vst [vmem:[%s218 + $0x1c] sm:$0xf] %v1451
        %1580 = vst [vmem:[%s218 + $0x20] sm:$0xf] %v1452
        %1581 = vst [vmem:[%s218 + $0x24] sm:$0xf] %v1453
        %1582 = vst [vmem:[%s218 + $0x28] sm:$0xf] %v1454
        %1583 = vst [vmem:[%s218 + $0x2c] sm:$0xf] %v1455
        %1584 = vst [vmem:[%s218 + $0x30] sm:$0xf] %v1456
        %1585 = vst [vmem:[%s218 + $0x34] sm:$0xf] %v1457
        %1586 = vst [vmem:[%s218 + $0x38] sm:$0xf] %v1458
        %1587 = vst [vmem:[%s218 + $0x3c] sm:$0xf] %v1459
        %1588 = vst [vmem:[%s218 + $0x40] sm:$0xf] %v1460
        %1589 = vst [vmem:[%s218 + $0x44] sm:$0xf] %v1461
        %1590 = vst [vmem:[%s218 + $0x48] sm:$0xf] %v1462
        %1591 = vst [vmem:[%s218 + $0x4c] sm:$0xf] %v1463
        %1592 = vst [vmem:[%s218 + $0x50] sm:$0xf] %v1464
        %1593 = vst [vmem:[%s218 + $0x54] sm:$0xf] %v1465
        %1594 = vst [vmem:[%s218 + $0x58] sm:$0xf] %v1466
        %1595 = vst [vmem:[%s218 + $0x5c] sm:$0xf] %v1467
        %1596 = vst [vmem:[%s218 + $0x60] sm:$0xf] %v1468
        %1597 = vst [vmem:[%s218 + $0x64] sm:$0xf] %v1469
        %1598 = vst [vmem:[%s218 + $0x68] sm:$0xf] %v1470
        %1599 = vst [vmem:[%s218 + $0x6c] sm:$0xf] %v1471
        %1600 = vst [vmem:[%s218 + $0x70] sm:$0xf] %v1472
        %1601 = vst [vmem:[%s218 + $0x74] sm:$0xf] %v1473
        %1602 = vst [vmem:[%s218 + $0x78] sm:$0xf] %v1474
        %1603 = vst [vmem:[%s218 + $0x7c] sm:$0xf] %v1475
        %1604 = vst [vmem:[%s218 + $0x80] sm:$0xf] %v1476
        %1605 = vst [vmem:[%s218 + $0x84] sm:$0xf] %v1477
        %1606 = vst [vmem:[%s218 + $0x88] sm:$0xf] %v1478
        %1607 = vst [vmem:[%s218 + $0x8c] sm:$0xf] %v1479
        %1608 = vst [vmem:[%s218 + $0x90] sm:$0xf] %v1480
        %1609 = vst [vmem:[%s218 + $0x94] sm:$0xf] %v1481
        %1610 = vst [vmem:[%s218 + $0x98] sm:$0xf] %v1482
        %1611 = vst [vmem:[%s218 + $0x9c] sm:$0xf] %v1483
        %1612 = vst [vmem:[%s218 + $0xa0] sm:$0xf] %v1484
        %1613 = vst [vmem:[%s218 + $0xa4] sm:$0xf] %v1485
        %1614 = vst [vmem:[%s218 + $0xa8] sm:$0xf] %v1486
        %1615 = vst [vmem:[%s218 + $0xac] sm:$0xf] %v1487
        %1616 = vst [vmem:[%s218 + $0xb0] sm:$0xf] %v1488
        %1617 = vst [vmem:[%s218 + $0xb4] sm:$0xf] %v1489
        %1618 = vst [vmem:[%s218 + $0xb8] sm:$0xf] %v1490
        %1619 = vst [vmem:[%s218 + $0xbc] sm:$0xf] %v1491
        %1620 = vst [vmem:[%s218 + $0xc0] sm:$0xf] %v1492
        %1621 = vst [vmem:[%s218 + $0xc4] sm:$0xf] %v1493
        %1622 = vst [vmem:[%s218 + $0xc8] sm:$0xf] %v1494
        %1623 = vst [vmem:[%s218 + $0xcc] sm:$0xf] %v1495
        %1624 = vst [vmem:[%s218 + $0xd0] sm:$0xf] %v1496
        %1625 = vst [vmem:[%s218 + $0xd4] sm:$0xf] %v1497
        %1626 = vst [vmem:[%s218 + $0xd8] sm:$0xf] %v1498
        %1627 = vst [vmem:[%s218 + $0xdc] sm:$0xf] %v1499
        %1628 = vst [vmem:[%s218 + $0xe0] sm:$0xf] %v1500
        %1629 = vst [vmem:[%s218 + $0xe4] sm:$0xf] %v1501
        %1630 = vst [vmem:[%s218 + $0xe8] sm:$0xf] %v1502
        %1631 = vst [vmem:[%s218 + $0xec] sm:$0xf] %v1503
        %1632 = vst [vmem:[%s218 + $0xf0] sm:$0xf] %v1504
        %1633 = vst [vmem:[%s218 + $0xf4] sm:$0xf] %v1505
        %1634 = vst [vmem:[%s218 + $0xf8] sm:$0xf] %v1506
        %1635 = vst [vmem:[%s218 + $0xfc] sm:$0xf] %v1507
        %s1636 = sand.u32 %s137, 1
        %s1637 = scalar_lea.sflag [#allocation3], %s1636
        %s1638 = sand.u32 %s137, 1
        %s1639 = smul.addr %s1638, 256
        %s1640 = scalar_lea.vmem [#allocation2], %s1639
        // Predicated region
        $region41: #{tpu_custom_call.1} parent=39 // pred_check
          %p1641 = pneg %p147
        $region42: #{tpu_custom_call.1} parent=39 // pred_check_branch
          %1643 = sbr.rel (%p1641) target = $region44
        $region43: #{tpu_custom_call.1} parent=39 // pred_region
          %s1644 = smul.u32 64, %s19
          %s1646 = ssub.s32 4096, 4096
          %1647 = vsyncadd %s1637, %s1646
          %s1648 = smul.addr %s1644, 64
          %s1649 = scalar_lea.hbm %s5, %s1648
          %s1650 = sshll.u32 %s1640, 4
          %s1651 = int_to_ptr.vmem [resolvable:$true] %s1650
          %1656 = dma.vmem_to_hbm [thread:$0]  %s1651, 4096, %s1649, %s1637, 64, 64, 4
        $region44: #{tpu_custom_call.1} parent=39 // pred_fallthru
          _
      $region40: #{tpu_custom_call.1} parent=5 // pred_fallthru
        _
      %p1657 = scmp.le.s32.totalorder 2, %s14
      // Predicated region
      $region45: #{tpu_custom_call.1} parent=5 // pred_check
        %p1658 = pneg %p1657
      $region46: #{tpu_custom_call.1} parent=5 // pred_check_branch
        %1660 = sbr.rel (%p1658) target = $region48
      $region47: #{tpu_custom_call.1} parent=5 // pred_region
        %s1661 = ssub.s32 %s14, 2
        // Predicated region
        $region49: #{tpu_custom_call.1} parent=47 // pred_check
          %p1662 = pneg %p153
        $region50: #{tpu_custom_call.1} parent=47 // pred_check_branch
          %1664 = sbr.rel (%p1662) target = $region52
        $region51: #{tpu_custom_call.1} parent=47 // pred_region
          %s1665 = sand.u32 %s138, 1
          %s1666 = scalar_lea.sflag [#allocation3], %s1665
          %s1667 = sand.u32 %s138, 1
          %s1668 = smul.addr %s1667, 256
          %s1669 = scalar_lea.vmem [#allocation2], %s1668
          %1670 = dma.done %s1666, 4096
        $region52: #{tpu_custom_call.1} parent=47 // pred_fallthru
          _
      $region48: #{tpu_custom_call.1} parent=5 // pred_fallthru
        _
    $region6: #{tpu_custom_call.1} parent=1 // loop_footer
      %s18 = sadd.s32 1, %s14
    $region7: #{tpu_custom_call.1} parent=1 // loop_footer_branch
      %13 = sbr.rel target = $region3
    $region8: #{tpu_custom_call.1} parent=1 // loop_exit
      _
    %1671 = vsyncpa [#allocation3], 1
    %s1672 = scalar_lea.sflag [#allocation3], 1
    %1673 = vsyncpa %s1672, 1

</llo_original>
